<compile_context>
chip_gen: v7x
topology: tpu7x:2x2x1
jax: 0.10.0
libtpu: 0.0.40
codegen_flags: <defaults>
</compile_context>

<pallas_src>
import functools

import numpy as np

import jax
import jax.numpy as jnp
from jax import lax
from jax.experimental import pallas as pl
from jax.experimental.pallas import tpu as pltpu


# ---------------------------------------------------------------------------
# Host-side packing helpers (run once on concrete weights; plain numpy)
# ---------------------------------------------------------------------------
def _band_weight_3x3(w_oihw, W):
    """(Cout, Cin, 3, 3) -> (3, W*Cin, W*Cout) banded matrices.

    Band ky maps the flattened (w_in, ci) lane axis to the flattened
    (w_out, co) lane axis; the kx taps and the 'SAME' zero padding along W are
    folded into the band, so a 3x3 conv is 3 matmuls (one per ky, with the
    ky=0/2 ones applied to the row above/below)."""
    Co, Ci, KH, KW = w_oihw.shape
    w = np.asarray(w_oihw, np.float32)
    out = np.zeros((KH, W * Ci, W * Co), np.float32)
    for ky in range(KH):
        for wo in range(W):
            for kx in range(KW):
                wi = wo + kx - 1
                if 0 <= wi < W:
                    out[ky, wi * Ci:(wi + 1) * Ci, wo * Co:(wo + 1) * Co] = \
                        w[:, :, ky, kx].T
    return out


def _band_weight_1x1(w_oihw, W):
    """(Cout, Cin, 1, 1) -> (W*Cin, W*Cout) block-diagonal matrix."""
    Co, Ci = w_oihw.shape[:2]
    w = np.asarray(w_oihw, np.float32)[:, :, 0, 0].T     # (Ci, Co)
    out = np.zeros((W * Ci, W * Co), np.float32)
    for wo in range(W):
        out[wo * Ci:(wo + 1) * Ci, wo * Co:(wo + 1) * Co] = w
    return out


def _auto_batch_tile(n, h):
    """Largest divisor of n with b*h <= 256 rows, preferring >=4 grid steps."""
    cap = max(1, 256 // h)
    divs = [b for b in range(1, n + 1) if n % b == 0 and b <= cap]
    for min_steps in (4, 2, 1):
        cands = [b for b in divs if n // b >= min_steps]
        if cands:
            return max(cands)
    return 1


# ---------------------------------------------------------------------------
# Pallas kernel: one grid step = B images stacked along the M / sublane axis
# ---------------------------------------------------------------------------
def _dblock_kernel(x_ref, wc1_ref, w31a_ref, w31c_ref, w32_ref,
                   b1_ref, b31_ref, b32_ref, md_ref, mu_ref,
                   out_ref, acc31_ref, y1_ref, acc2_ref, *, cout):
    _, BH, K = x_ref.shape                 # BH = B*H rows, K = W*Cin lanes
    N1 = y1_ref.shape[1]                   # N1 = W*Cout lanes
    BH2 = out_ref.shape[1]                 # BH2 = B*H//2 pooled rows
    f32 = jnp.float32

    x = x_ref[0]                           # (BH, K), mxu dtype — no staging copy
    md = md_ref[...]                       # (BH, 1): 0 at last row of each image
    mu = mu_ref[...]                       # (BH, 1): 0 at first row of each image

    # conv1 (1x1) column-fused with conv3_1's ky=1 band: one matmul with
    # N = N1 + K, conv1 columns first so both output slices are 128-aligned.
    mid = jnp.dot(x, wc1_ref[...], preferred_element_type=f32)   # (BH, N1+K)
    y1_ref[...] = mid[:, :N1] + b1_ref[...]                      # 1x1 branch
    acc31_ref[...] = mid[:, N1:] + b31_ref[...]                  # ky=1 of conv3_1

    # conv3_1 shifted ky taps (row r-1 -> ky=0, row r+1 -> ky=2), accumulated
    # into VMEM scratch at a one-row offset; the 0/1 masks zero the source
    # rows that would bleed across image boundaries in the row-stacked layout.
    xmd = x * md
    xmu = x * mu
    acc31_ref[1:BH, :] = acc31_ref[1:BH, :] + jnp.dot(
        xmd[:BH - 1, :], w31a_ref[...], preferred_element_type=f32)
    acc31_ref[0:BH - 1, :] = acc31_ref[0:BH - 1, :] + jnp.dot(
        xmu[1:, :], w31c_ref[...], preferred_element_type=f32)

    # ReLU (f32), cast once to the MXU dtype for conv3_2.
    t = jnp.maximum(acc31_ref[...], 0.0).astype(x.dtype)         # (BH, K)

    # conv3_2 — same banded / shifted-row scheme, accumulated in VMEM scratch.
    acc2_ref[...] = jnp.dot(t, w32_ref[1],
                            preferred_element_type=f32) + b32_ref[...]
    tmd = t * md
    tmu = t * mu
    acc2_ref[1:BH, :] = acc2_ref[1:BH, :] + jnp.dot(
        tmd[:BH - 1, :], w32_ref[0], preferred_element_type=f32)
    acc2_ref[0:BH - 1, :] = acc2_ref[0:BH - 1, :] + jnp.dot(
        tmu[1:, :], w32_ref[2], preferred_element_type=f32)

    # Fused 2x2 / stride-2 max-pool of both branches, on the VPU/XLU only:
    #   H direction: max of even / odd row phases (strided VMEM reads).
    #   W direction: max against a lane roll by Cout; only the even-w lane
    #     groups are meaningful — the wrapper slices them out (pure layout).
    def pool(ref):
        hp = jnp.maximum(ref[pl.ds(0, BH2, stride=2), :],
                         ref[pl.ds(1, BH2, stride=2), :])
        return jnp.maximum(hp, pltpu.roll(hp, shift=N1 - cout, axis=1))

    out_ref[0] = (pool(y1_ref) + pool(acc2_ref)).astype(out_ref.dtype)


# ---------------------------------------------------------------------------
# Wrapper
# ---------------------------------------------------------------------------
def dblock_down_first(x_nchw, params, *, batch_tile=None,
                      mxu_dtype=jnp.bfloat16):
    """x_nchw: (N, Cin, H, W) float32 -> (N, Cout, H//2, W//2) float32.

    Default mxu_dtype=bfloat16 (f32 accumulation); pass jnp.float32 for a
    bit-tighter match against an f32 reference (the post-ReLU intermediate is
    rounded to bf16 in the default mode, so it drifts a little further)."""
    w1, b1, w31, b31, w32, b32 = params
    N, Cin, H, W = x_nchw.shape
    Cout = w1.shape[0]
    assert H % 2 == 0 and W % 2 == 0, "2x2/stride-2 maxpool needs even H, W"
    B = batch_tile if batch_tile is not None else _auto_batch_tile(N, H)
    assert N % B == 0, "batch_tile must divide N"
    G = N // B
    Hh, Wh = H // 2, W // 2
    BH, BH2 = B * H, B * Hh
    K = W * Cin                 # input / intermediate lane width
    N1 = W * Cout               # conv1 / conv3_2 output lane width

    # ---- one-time parameter packing (host-side numpy); per-image bands are
    #      shared across the batch tile (no block-diagonal replication) -------
    w31_band = _band_weight_3x3(w31, W)                  # (3, K, K)
    w32_band = _band_weight_3x3(w32, W)                  # (3, K, N1)
    w1_band = _band_weight_1x1(w1, W)                    # (K, N1)
    wc1 = np.concatenate([w1_band, w31_band[1]], axis=1)  # (K, N1 + K)
    b1r = np.tile(np.asarray(b1, np.float32), W)[None, :]    # (1, N1)
    b31r = np.tile(np.asarray(b31, np.float32), W)[None, :]  # (1, K)
    b32r = np.tile(np.asarray(b32, np.float32), W)[None, :]  # (1, N1)

    # 0/1 row masks for the shifted taps (kill cross-image bleed).
    rows = np.arange(BH)
    m_down = (rows % H != H - 1).astype(np.float32)[:, None]    # (BH, 1)
    m_up = (rows % H != 0).astype(np.float32)[:, None]          # (BH, 1)

    # ---- pack input: rows = (image, h) on the M/sublane axis,
    #      lanes = (w, ci).  Single small XLA transpose, no padding. ----------
    xg = x_nchw.reshape(G, B, Cin, H, W)
    xg = jnp.transpose(xg, (0, 1, 3, 4, 2)).reshape(G, BH, K).astype(mxu_dtype)

    kernel = functools.partial(_dblock_kernel, cout=Cout)

    # VMEM use at these sizes is well under 1 MiB; at real SNGAN widths
    # (Cin >= 128) switch to per-tap channel matmuls / W-tiling and set
    # vmem_limit_bytes explicitly (64 MiB budget on v7x).
    z = pl.pallas_call(
        kernel,
        out_shape=jax.ShapeDtypeStruct((G, BH2, N1), jnp.float32),
        grid_spec=pltpu.PrefetchScalarGridSpec(
            num_scalar_prefetch=0,
            grid=(G,),
            in_specs=[
                pl.BlockSpec((1, BH, K), lambda g: (g, 0, 0)),     # x tile
                pl.BlockSpec(wc1.shape, lambda g: (0, 0)),         # conv1+ky1
                pl.BlockSpec((K, K), lambda g: (0, 0)),            # conv3_1 ky0
                pl.BlockSpec((K, K), lambda g: (0, 0)),            # conv3_1 ky2
                pl.BlockSpec((3, K, N1), lambda g: (0, 0, 0)),     # conv3_2
                pl.BlockSpec(b1r.shape, lambda g: (0, 0)),
                pl.BlockSpec(b31r.shape, lambda g: (0, 0)),
                pl.BlockSpec(b32r.shape, lambda g: (0, 0)),
                pl.BlockSpec((BH, 1), lambda g: (0, 0)),           # mask down
                pl.BlockSpec((BH, 1), lambda g: (0, 0)),           # mask up
            ],
            out_specs=pl.BlockSpec((1, BH2, N1), lambda g: (g, 0, 0)),
            scratch_shapes=[pltpu.VMEM((BH, K), jnp.float32),      # conv3_1 acc
                            pltpu.VMEM((BH, N1), jnp.float32),     # conv1 out
                            pltpu.VMEM((BH, N1), jnp.float32)],    # conv3_2 acc
        ),
        compiler_params=pltpu.CompilerParams(
            dimension_semantics=("parallel",)),
    )(xg,
      jnp.asarray(wc1, mxu_dtype),
      jnp.asarray(w31_band[0], mxu_dtype),
      jnp.asarray(w31_band[2], mxu_dtype),
      jnp.asarray(w32_band, mxu_dtype),
      jnp.asarray(b1r), jnp.asarray(b31r), jnp.asarray(b32r),
      jnp.asarray(m_down, mxu_dtype), jnp.asarray(m_up, mxu_dtype))

    # ---- unpack: keep the even-w lane groups (pure layout) and restore NCHW.
    z = z.reshape(G, B, Hh, W, Cout)[:, :, :, 0::2, :]     # (G, B, Hh, Wh, Cout)
    return jnp.transpose(z, (0, 1, 4, 2, 3)).reshape(N, Cout, Hh, Wh)


# ---------------------------------------------------------------------------
# Parameter setup (deterministic, synthetic) + spectral normalization
# ---------------------------------------------------------------------------
def spectral_normalize(w_oihw, n_iter=5):
    """Divide conv weight (OIHW) by its spectral norm (power iteration)."""
    o = w_oihw.shape[0]
    w_mat = w_oihw.reshape(o, -1)
    u = jnp.ones((o,), jnp.float32) / jnp.sqrt(o)
    v = None
    for _ in range(n_iter):
        v = w_mat.T @ u
        v = v / (jnp.linalg.norm(v) + 1e-12)
        u = w_mat @ v
        u = u / (jnp.linalg.norm(u) + 1e-12)
    sigma = u @ (w_mat @ v)
    return w_oihw / sigma


def _bf16_exact(a):
    # Keep test inputs/weights bf16-representable so the bf16 MXU path and the
    # f32 XLA reference agree tightly (only the post-ReLU rounding differs).
    return a.astype(jnp.bfloat16).astype(jnp.float32)


def make_params(key, in_channels, out_channels):
    ks = jax.random.split(key, 6)
    w1 = jax.random.normal(ks[0], (out_channels, in_channels, 1, 1),
                           jnp.float32) * 0.2
    b1 = jax.random.normal(ks[1], (out_channels,), jnp.float32) * 0.05
    w31 = jax.random.normal(ks[2], (in_channels, in_channels, 3, 3),
                            jnp.float32) * 0.2
    b31 = jax.random.normal(ks[3], (in_channels,), jnp.float32) * 0.05
    w32 = jax.random.normal(ks[4], (out_channels, in_channels, 3, 3),
                            jnp.float32) * 0.2
    b32 = jax.random.normal(ks[5], (out_channels,), jnp.float32) * 0.05
    # SpectralNorm wrapper: forward uses W / sigma(W).
    # TODO(synk): PyTorch SpectralNorm does one power iteration per forward
    # with a persistent random u; the deterministic 5-step iteration here
    # matches inference semantics, not training-time updates.
    w1 = _bf16_exact(spectral_normalize(w1))
    w31 = _bf16_exact(spectral_normalize(w31))
    w32 = _bf16_exact(spectral_normalize(w32))
    return w1, b1, w31, b31, w32, b32


# ---------------------------------------------------------------------------
# Pure-JAX reference (NCHW, matches the PyTorch forward)
# ---------------------------------------------------------------------------
def _maxpool2x2(x):
    return lax.reduce_window(x, -jnp.inf, lax.max,
                             (1, 1, 2, 2), (1, 1, 2, 2), 'VALID')


def ref_forward(x, params):
    w1, b1, w31, b31, w32, b32 = params
    dn = ('NCHW', 'OIHW', 'NCHW')
    conv = lambda a, w, pad: lax.conv_general_dilated(
        a, w, (1, 1), pad, dimension_numbers=dn,
        precision=lax.Precision.HIGHEST)
    x1 = conv(x, w1, 'VALID') + b1[None, :, None, None]
    x1 = _maxpool2x2(x1)
    x2 = conv(x, w31, 'SAME') + b31[None, :, None, None]
    x2 = jnp.maximum(x2, 0.0)
    x2 = conv(x2, w32, 'SAME') + b32[None, :, None, None]
    x2 = _maxpool2x2(x2)
    return x1 + x2


# ---------------------------------------------------------------------------
if __name__ == "__main__":
    key = jax.random.PRNGKey(0)
    kx, kp = jax.random.split(key)

    # N=16 lets the auto batch tile pick B=4 (M = 64 matmul rows/step) while
    # keeping a 4-step grid for pipelining / megacore sharding.
    N, Cin, Cout, H, W = 16, 4, 8, 16, 16
    x = _bf16_exact(jax.random.normal(kx, (N, Cin, H, W), jnp.float32))
    params = make_params(kp, Cin, Cout)

    ref = jax.block_until_ready(ref_forward(x, params))

    # Default path: bf16 MXU inputs, f32 accumulation.  The post-ReLU
    # intermediate is rounded to bf16 before conv3_2, hence the looser bound.
    out_bf16 = jax.block_until_ready(dblock_down_first(x, params))
    np.testing.assert_allclose(np.asarray(out_bf16), np.asarray(ref),
                               rtol=1e-2, atol=1e-2)

    # f32 MXU path: tight check of the banded-matmul / shifted-tap / pooling
    # indexing (any tap or mask bug produces O(0.1-1) errors).
    out_f32 = jax.block_until_ready(
        dblock_down_first(x, params, mxu_dtype=jnp.float32))
    np.testing.assert_allclose(np.asarray(out_f32), np.asarray(ref),
                               rtol=5e-3, atol=5e-3)

    print("KERNEL_OK")
</pallas_src>

<mosaic_0001>
module attributes {stable_mosaic.version = 11 : i64} {
  func.func @_dblock_kernel(%arg0: i32, %arg1: memref<1x64x64xbf16, #tpu.memory_space<vmem>>, %arg2: memref<64x192xbf16, #tpu.memory_space<vmem>>, %arg3: memref<64x64xbf16, #tpu.memory_space<vmem>>, %arg4: memref<64x64xbf16, #tpu.memory_space<vmem>>, %arg5: memref<3x64x128xbf16, #tpu.memory_space<vmem>>, %arg6: memref<1x128xf32, #tpu.memory_space<vmem>>, %arg7: memref<1x64xf32, #tpu.memory_space<vmem>>, %arg8: memref<1x128xf32, #tpu.memory_space<vmem>>, %arg9: memref<64x1xbf16, #tpu.memory_space<vmem>>, %arg10: memref<64x1xbf16, #tpu.memory_space<vmem>>, %arg11: memref<1x32x128xf32, #tpu.memory_space<vmem>>, %arg12: memref<64x64xf32, #tpu.memory_space<vmem>>, %arg13: memref<64x128xf32, #tpu.memory_space<vmem>>, %arg14: memref<64x128xf32, #tpu.memory_space<vmem>>) attributes {dimension_semantics = [#tpu.dimension_semantics<parallel>], iteration_bounds = array<i64: 4>, scalar_prefetch = 0 : i64, scratch_operands = 3 : i64, tpu.core_type = #tpu.core_type<tc>, window_params = [{transform_indices = @transform_0, window_bounds = array<i64: 1, 64, 64>}, {pipeline_mode = #tpu.pipeline_mode<synchronous>, transform_indices = @transform_1, window_bounds = array<i64: 64, 192>}, {pipeline_mode = #tpu.pipeline_mode<synchronous>, transform_indices = @transform_2, window_bounds = array<i64: 64, 64>}, {pipeline_mode = #tpu.pipeline_mode<synchronous>, transform_indices = @transform_3, window_bounds = array<i64: 64, 64>}, {pipeline_mode = #tpu.pipeline_mode<synchronous>, transform_indices = @transform_4, window_bounds = array<i64: 3, 64, 128>}, {pipeline_mode = #tpu.pipeline_mode<synchronous>, transform_indices = @transform_5, window_bounds = array<i64: 1, 128>}, {pipeline_mode = #tpu.pipeline_mode<synchronous>, transform_indices = @transform_6, window_bounds = array<i64: 1, 64>}, {pipeline_mode = #tpu.pipeline_mode<synchronous>, transform_indices = @transform_7, window_bounds = array<i64: 1, 128>}, {pipeline_mode = #tpu.pipeline_mode<synchronous>, transform_indices = @transform_8, window_bounds = array<i64: 64, 1>}, {pipeline_mode = #tpu.pipeline_mode<synchronous>, transform_indices = @transform_9, window_bounds = array<i64: 64, 1>}, {transform_indices = @transform_10, window_bounds = array<i64: 1, 32, 128>}]} {
    %c0 = arith.constant 0 : index
    %c0_0 = arith.constant 0 : index
    %c0_1 = arith.constant 0 : index
    %0 = vector.load %arg1[%c0, %c0_0, %c0_1] : memref<1x64x64xbf16, #tpu.memory_space<vmem>>, vector<1x64x64xbf16>
    %1 = vector.shape_cast %0 : vector<1x64x64xbf16> to vector<64x64xbf16>
    %c0_2 = arith.constant 0 : index
    %c0_3 = arith.constant 0 : index
    %2 = vector.load %arg9[%c0_2, %c0_3] : memref<64x1xbf16, #tpu.memory_space<vmem>>, vector<64x1xbf16>
    %c0_4 = arith.constant 0 : index
    %c0_5 = arith.constant 0 : index
    %3 = vector.load %arg10[%c0_4, %c0_5] : memref<64x1xbf16, #tpu.memory_space<vmem>>, vector<64x1xbf16>
    %c0_6 = arith.constant 0 : index
    %c0_7 = arith.constant 0 : index
    %4 = vector.load %arg2[%c0_6, %c0_7] : memref<64x192xbf16, #tpu.memory_space<vmem>>, vector<64x192xbf16>
    %cst = arith.constant dense<0.000000e+00> : vector<64x192xf32>
    %5 = tpu.matmul %1, %4, %cst {dimension_numbers = #tpu.dot_dimension_numbers<[1], [0], [0], [1], [0, 0, 1, 1], [], []>} : vector<64x64xbf16>, vector<64x192xbf16>, vector<64x192xf32> -> vector<64x192xf32>
    %6 = vector.extract_strided_slice %5 {offsets = [0, 0], sizes = [64, 128], strides = [1, 1]} : vector<64x192xf32> to vector<64x128xf32>
    %c0_8 = arith.constant 0 : index
    %c0_9 = arith.constant 0 : index
    %7 = vector.load %arg6[%c0_8, %c0_9] : memref<1x128xf32, #tpu.memory_space<vmem>>, vector<1x128xf32>
    %8 = vector.broadcast %7 : vector<1x128xf32> to vector<64x128xf32>
    %9 = arith.addf %6, %8 : vector<64x128xf32>
    %c0_10 = arith.constant 0 : index
    %c0_11 = arith.constant 0 : index
    %10 = vector.load %arg13[%c0_10, %c0_11] : memref<64x128xf32, #tpu.memory_space<vmem>>, vector<64x128xf32>
    tpu.vector_store %arg13[%c0_10, %c0_11], %9 {strides = array<i32>} : memref<64x128xf32, #tpu.memory_space<vmem>>, vector<64x128xf32>,
    %11 = vector.extract_strided_slice %5 {offsets = [0, 128], sizes = [64, 64], strides = [1, 1]} : vector<64x192xf32> to vector<64x64xf32>
    %c0_12 = arith.constant 0 : index
    %c0_13 = arith.constant 0 : index
    %12 = vector.load %arg7[%c0_12, %c0_13] : memref<1x64xf32, #tpu.memory_space<vmem>>, vector<1x64xf32>
    %13 = vector.broadcast %12 : vector<1x64xf32> to vector<64x64xf32>
    %14 = arith.addf %11, %13 : vector<64x64xf32>
    %c0_14 = arith.constant 0 : index
    %c0_15 = arith.constant 0 : index
    %15 = vector.load %arg12[%c0_14, %c0_15] : memref<64x64xf32, #tpu.memory_space<vmem>>, vector<64x64xf32>
    tpu.vector_store %arg12[%c0_14, %c0_15], %14 {strides = array<i32>} : memref<64x64xf32, #tpu.memory_space<vmem>>, vector<64x64xf32>,
    %16 = vector.broadcast %2 : vector<64x1xbf16> to vector<64x64xbf16>
    %17 = arith.mulf %1, %16 : vector<64x64xbf16>
    %18 = vector.broadcast %3 : vector<64x1xbf16> to vector<64x64xbf16>
    %19 = arith.mulf %1, %18 : vector<64x64xbf16>
    %c1 = arith.constant 1 : index
    %c0_16 = arith.constant 0 : index
    %20 = vector.load %arg12[%c1, %c0_16] : memref<64x64xf32, #tpu.memory_space<vmem>>, vector<63x64xf32>
    %21 = vector.extract_strided_slice %17 {offsets = [0, 0], sizes = [63, 64], strides = [1, 1]} : vector<64x64xbf16> to vector<63x64xbf16>
    %c0_17 = arith.constant 0 : index
    %c0_18 = arith.constant 0 : index
    %22 = vector.load %arg3[%c0_17, %c0_18] : memref<64x64xbf16, #tpu.memory_space<vmem>>, vector<64x64xbf16>
    %cst_19 = arith.constant dense<0.000000e+00> : vector<63x64xf32>
    %23 = tpu.matmul %21, %22, %cst_19 {dimension_numbers = #tpu.dot_dimension_numbers<[1], [0], [0], [1], [0, 0, 1, 1], [], []>} : vector<63x64xbf16>, vector<64x64xbf16>, vector<63x64xf32> -> vector<63x64xf32>
    %24 = arith.addf %20, %23 : vector<63x64xf32>
    %c1_20 = arith.constant 1 : index
    %c0_21 = arith.constant 0 : index
    %25 = vector.load %arg12[%c1_20, %c0_21] : memref<64x64xf32, #tpu.memory_space<vmem>>, vector<63x64xf32>
    tpu.vector_store %arg12[%c1_20, %c0_21], %24 {strides = array<i32>} : memref<64x64xf32, #tpu.memory_space<vmem>>, vector<63x64xf32>,
    %c0_22 = arith.constant 0 : index
    %c0_23 = arith.constant 0 : index
    %26 = vector.load %arg12[%c0_22, %c0_23] : memref<64x64xf32, #tpu.memory_space<vmem>>, vector<63x64xf32>
    %27 = vector.extract_strided_slice %19 {offsets = [1, 0], sizes = [63, 64], strides = [1, 1]} : vector<64x64xbf16> to vector<63x64xbf16>
    %c0_24 = arith.constant 0 : index
    %c0_25 = arith.constant 0 : index
    %28 = vector.load %arg4[%c0_24, %c0_25] : memref<64x64xbf16, #tpu.memory_space<vmem>>, vector<64x64xbf16>
    %cst_26 = arith.constant dense<0.000000e+00> : vector<63x64xf32>
    %29 = tpu.matmul %27, %28, %cst_26 {dimension_numbers = #tpu.dot_dimension_numbers<[1], [0], [0], [1], [0, 0, 1, 1], [], []>} : vector<63x64xbf16>, vector<64x64xbf16>, vector<63x64xf32> -> vector<63x64xf32>
    %30 = arith.addf %26, %29 : vector<63x64xf32>
    %c0_27 = arith.constant 0 : index
    %c0_28 = arith.constant 0 : index
    %31 = vector.load %arg12[%c0_27, %c0_28] : memref<64x64xf32, #tpu.memory_space<vmem>>, vector<63x64xf32>
    tpu.vector_store %arg12[%c0_27, %c0_28], %30 {strides = array<i32>} : memref<64x64xf32, #tpu.memory_space<vmem>>, vector<63x64xf32>,
    %c0_29 = arith.constant 0 : index
    %c0_30 = arith.constant 0 : index
    %32 = vector.load %arg12[%c0_29, %c0_30] : memref<64x64xf32, #tpu.memory_space<vmem>>, vector<64x64xf32>
    %cst_31 = arith.constant 0.000000e+00 : f32
    %33 = vector.broadcast %cst_31 : f32 to vector<64x64xf32>
    %34 = arith.maximumf %32, %33 : vector<64x64xf32>
    %35 = arith.truncf %34 : vector<64x64xf32> to vector<64x64xbf16>
    %c1_32 = arith.constant 1 : index
    %c0_33 = arith.constant 0 : index
    %c0_34 = arith.constant 0 : index
    %36 = vector.load %arg5[%c1_32, %c0_33, %c0_34] : memref<3x64x128xbf16, #tpu.memory_space<vmem>>, vector<1x64x128xbf16>
    %37 = vector.shape_cast %36 : vector<1x64x128xbf16> to vector<64x128xbf16>
    %cst_35 = arith.constant dense<0.000000e+00> : vector<64x128xf32>
    %38 = tpu.matmul %35, %37, %cst_35 {dimension_numbers = #tpu.dot_dimension_numbers<[1], [0], [0], [1], [0, 0, 1, 1], [], []>} : vector<64x64xbf16>, vector<64x128xbf16>, vector<64x128xf32> -> vector<64x128xf32>
    %c0_36 = arith.constant 0 : index
    %c0_37 = arith.constant 0 : index
    %39 = vector.load %arg8[%c0_36, %c0_37] : memref<1x128xf32, #tpu.memory_space<vmem>>, vector<1x128xf32>
    %40 = vector.broadcast %39 : vector<1x128xf32> to vector<64x128xf32>
    %41 = arith.addf %38, %40 : vector<64x128xf32>
    %c0_38 = arith.constant 0 : index
    %c0_39 = arith.constant 0 : index
    %42 = vector.load %arg14[%c0_38, %c0_39] : memref<64x128xf32, #tpu.memory_space<vmem>>, vector<64x128xf32>
    tpu.vector_store %arg14[%c0_38, %c0_39], %41 {strides = array<i32>} : memref<64x128xf32, #tpu.memory_space<vmem>>, vector<64x128xf32>,
    %43 = vector.broadcast %2 : vector<64x1xbf16> to vector<64x64xbf16>
    %44 = arith.mulf %35, %43 : vector<64x64xbf16>
    %45 = vector.broadcast %3 : vector<64x1xbf16> to vector<64x64xbf16>
    %46 = arith.mulf %35, %45 : vector<64x64xbf16>
    %c1_40 = arith.constant 1 : index
    %c0_41 = arith.constant 0 : index
    %47 = vector.load %arg14[%c1_40, %c0_41] : memref<64x128xf32, #tpu.memory_space<vmem>>, vector<63x128xf32>
    %48 = vector.extract_strided_slice %44 {offsets = [0, 0], sizes = [63, 64], strides = [1, 1]} : vector<64x64xbf16> to vector<63x64xbf16>
    %c0_42 = arith.constant 0 : index
    %c0_43 = arith.constant 0 : index
    %c0_44 = arith.constant 0 : index
    %49 = vector.load %arg5[%c0_42, %c0_43, %c0_44] : memref<3x64x128xbf16, #tpu.memory_space<vmem>>, vector<1x64x128xbf16>
    %50 = vector.shape_cast %49 : vector<1x64x128xbf16> to vector<64x128xbf16>
    %cst_45 = arith.constant dense<0.000000e+00> : vector<63x128xf32>
    %51 = tpu.matmul %48, %50, %cst_45 {dimension_numbers = #tpu.dot_dimension_numbers<[1], [0], [0], [1], [0, 0, 1, 1], [], []>} : vector<63x64xbf16>, vector<64x128xbf16>, vector<63x128xf32> -> vector<63x128xf32>
    %52 = arith.addf %47, %51 : vector<63x128xf32>
    %c1_46 = arith.constant 1 : index
    %c0_47 = arith.constant 0 : index
    %53 = vector.load %arg14[%c1_46, %c0_47] : memref<64x128xf32, #tpu.memory_space<vmem>>, vector<63x128xf32>
    tpu.vector_store %arg14[%c1_46, %c0_47], %52 {strides = array<i32>} : memref<64x128xf32, #tpu.memory_space<vmem>>, vector<63x128xf32>,
    %c0_48 = arith.constant 0 : index
    %c0_49 = arith.constant 0 : index
    %54 = vector.load %arg14[%c0_48, %c0_49] : memref<64x128xf32, #tpu.memory_space<vmem>>, vector<63x128xf32>
    %55 = vector.extract_strided_slice %46 {offsets = [1, 0], sizes = [63, 64], strides = [1, 1]} : vector<64x64xbf16> to vector<63x64xbf16>
    %c2 = arith.constant 2 : index
    %c0_50 = arith.constant 0 : index
    %c0_51 = arith.constant 0 : index
    %56 = vector.load %arg5[%c2, %c0_50, %c0_51] : memref<3x64x128xbf16, #tpu.memory_space<vmem>>, vector<1x64x128xbf16>
    %57 = vector.shape_cast %56 : vector<1x64x128xbf16> to vector<64x128xbf16>
    %cst_52 = arith.constant dense<0.000000e+00> : vector<63x128xf32>
    %58 = tpu.matmul %55, %57, %cst_52 {dimension_numbers = #tpu.dot_dimension_numbers<[1], [0], [0], [1], [0, 0, 1, 1], [], []>} : vector<63x64xbf16>, vector<64x128xbf16>, vector<63x128xf32> -> vector<63x128xf32>
    %59 = arith.addf %54, %58 : vector<63x128xf32>
    %c0_53 = arith.constant 0 : index
    %c0_54 = arith.constant 0 : index
    %60 = vector.load %arg14[%c0_53, %c0_54] : memref<64x128xf32, #tpu.memory_space<vmem>>, vector<63x128xf32>
    tpu.vector_store %arg14[%c0_53, %c0_54], %59 {strides = array<i32>} : memref<64x128xf32, #tpu.memory_space<vmem>>, vector<63x128xf32>,
    %c0_55 = arith.constant 0 : index
    %c0_56 = arith.constant 0 : index
    %61 = tpu.strided_load %arg13[%c0_55, %c0_56] {strides = array<i32: 2, 1>} : memref<64x128xf32, #tpu.memory_space<vmem>>, vector<32x128xf32>
    %c1_57 = arith.constant 1 : index
    %c0_58 = arith.constant 0 : index
    %62 = tpu.strided_load %arg13[%c1_57, %c0_58] {strides = array<i32: 2, 1>} : memref<64x128xf32, #tpu.memory_space<vmem>>, vector<32x128xf32>
    %63 = arith.maximumf %61, %62 : vector<32x128xf32>
    %c120_i32 = arith.constant 120 : i32
    %64 = tpu.dynamic_rotate %63 by %c120_i32 dim 1 : vector<32x128xf32>, i32 -> vector<32x128xf32>
    %65 = arith.maximumf %63, %64 : vector<32x128xf32>
    %c0_59 = arith.constant 0 : index
    %c0_60 = arith.constant 0 : index
    %66 = tpu.strided_load %arg14[%c0_59, %c0_60] {strides = array<i32: 2, 1>} : memref<64x128xf32, #tpu.memory_space<vmem>>, vector<32x128xf32>
    %c1_61 = arith.constant 1 : index
    %c0_62 = arith.constant 0 : index
    %67 = tpu.strided_load %arg14[%c1_61, %c0_62] {strides = array<i32: 2, 1>} : memref<64x128xf32, #tpu.memory_space<vmem>>, vector<32x128xf32>
    %68 = arith.maximumf %66, %67 : vector<32x128xf32>
    %c120_i32_63 = arith.constant 120 : i32
    %69 = tpu.dynamic_rotate %68 by %c120_i32_63 dim 1 : vector<32x128xf32>, i32 -> vector<32x128xf32>
    %70 = arith.maximumf %68, %69 : vector<32x128xf32>
    %71 = arith.addf %65, %70 : vector<32x128xf32>
    %c0_64 = arith.constant 0 : index
    %c0_65 = arith.constant 0 : index
    %c0_66 = arith.constant 0 : index
    %72 = vector.load %arg11[%c0_64, %c0_65, %c0_66] : memref<1x32x128xf32, #tpu.memory_space<vmem>>, vector<1x32x128xf32>
    %73 = vector.shape_cast %72 : vector<1x32x128xf32> to vector<32x128xf32>
    %74 = vector.shape_cast %71 : vector<32x128xf32> to vector<1x32x128xf32>
    tpu.vector_store %arg11[%c0_64, %c0_65, %c0_66], %74 {strides = array<i32>} : memref<1x32x128xf32, #tpu.memory_space<vmem>>, vector<1x32x128xf32>,
    return
  }
  func.func @transform_0(%arg0: i32) -> (i32, i32, i32) {
    %c0_i32 = arith.constant 0 : i32
    %c0_i32_0 = arith.constant 0 : i32
    %c0_i32_1 = arith.constant 0 : i32
    return %arg0, %c0_i32, %c0_i32_0 : i32, i32, i32
  }
  func.func @transform_1(%arg0: i32) -> (i32, i32) {
    %c0_i32 = arith.constant 0 : i32
    %c0_i32_0 = arith.constant 0 : i32
    %c0_i32_1 = arith.constant 0 : i32
    return %c0_i32, %c0_i32_0 : i32, i32
  }
  func.func @transform_2(%arg0: i32) -> (i32, i32) {
    %c0_i32 = arith.constant 0 : i32
    %c0_i32_0 = arith.constant 0 : i32
    %c0_i32_1 = arith.constant 0 : i32
    return %c0_i32, %c0_i32_0 : i32, i32
  }
  func.func @transform_3(%arg0: i32) -> (i32, i32) {
    %c0_i32 = arith.constant 0 : i32
    %c0_i32_0 = arith.constant 0 : i32
    %c0_i32_1 = arith.constant 0 : i32
    return %c0_i32, %c0_i32_0 : i32, i32
  }
  func.func @transform_4(%arg0: i32) -> (i32, i32, i32) {
    %c0_i32 = arith.constant 0 : i32
    %c0_i32_0 = arith.constant 0 : i32
    %c0_i32_1 = arith.constant 0 : i32
    %c0_i32_2 = arith.constant 0 : i32
    return %c0_i32, %c0_i32_0, %c0_i32_1 : i32, i32, i32
  }
  func.func @transform_5(%arg0: i32) -> (i32, i32) {
    %c0_i32 = arith.constant 0 : i32
    %c0_i32_0 = arith.constant 0 : i32
    %c0_i32_1 = arith.constant 0 : i32
    return %c0_i32, %c0_i32_0 : i32, i32
  }
  func.func @transform_6(%arg0: i32) -> (i32, i32) {
    %c0_i32 = arith.constant 0 : i32
    %c0_i32_0 = arith.constant 0 : i32
    %c0_i32_1 = arith.constant 0 : i32
    return %c0_i32, %c0_i32_0 : i32, i32
  }
  func.func @transform_7(%arg0: i32) -> (i32, i32) {
    %c0_i32 = arith.constant 0 : i32
    %c0_i32_0 = arith.constant 0 : i32
    %c0_i32_1 = arith.constant 0 : i32
    return %c0_i32, %c0_i32_0 : i32, i32
  }
  func.func @transform_8(%arg0: i32) -> (i32, i32) {
    %c0_i32 = arith.constant 0 : i32
    %c0_i32_0 = arith.constant 0 : i32
    %c0_i32_1 = arith.constant 0 : i32
    return %c0_i32, %c0_i32_0 : i32, i32
  }
  func.func @transform_9(%arg0: i32) -> (i32, i32) {
    %c0_i32 = arith.constant 0 : i32
    %c0_i32_0 = arith.constant 0 : i32
    %c0_i32_1 = arith.constant 0 : i32
    return %c0_i32, %c0_i32_0 : i32, i32
  }
  func.func @transform_10(%arg0: i32) -> (i32, i32, i32) {
    %c0_i32 = arith.constant 0 : i32
    %c0_i32_0 = arith.constant 0 : i32
    %c0_i32_1 = arith.constant 0 : i32
    return %arg0, %c0_i32, %c0_i32_0 : i32, i32, i32
  }
}

</mosaic_0001>

<llo_original>
// kernel: tpu_custom_call.1
$region0: #{tpu_custom_call.1}
  #allocation0 [shape = 'u32[]', space=smem, size = 0x4, offset = 0x4, fixed_abs, tag = 'smem constant byte address 0x4 - core index']
  #allocation1 [shape = 'u32[144,128]{1,0:T(1,128)}', space=vmem, size = 0x12000, scoped, tag = 'internal scratch']
  #allocation2 [shape = 'f32[64,64]{1,0:T(8,128)}', space=vmem, size = 0x8000, scoped, tag = 'scratch operand']
  #allocation3 [shape = 'f32[64,128]{1,0:T(8,128)}', space=vmem, size = 0x8000, scoped, tag = 'scratch operand']
  #allocation4 [shape = 'f32[64,128]{1,0:T(8,128)}', space=vmem, size = 0x8000, scoped, tag = 'scratch operand']
  %s0 = inlined_call_operand.hbm [shape: bf16[4,64,64], index: 0, kind: input, shape index: {}]
  %s1 = inlined_call_operand.vmem [shape: bf16[64,192], index: 1, kind: input, shape index: {}]
  %s2 = inlined_call_operand.hbm [shape: bf16[64,64], index: 2, kind: input, shape index: {}]
  %s3 = inlined_call_operand.hbm [shape: bf16[64,64], index: 3, kind: input, shape index: {}]
  %s4 = inlined_call_operand.hbm [shape: bf16[3,64,128], index: 4, kind: input, shape index: {}]
  %s5 = inlined_call_operand.vmem [shape: f32[1,128], index: 5, kind: input, shape index: {}]
  %s6 = inlined_call_operand.vmem [shape: f32[1,64], index: 6, kind: input, shape index: {}]
  %s7 = inlined_call_operand.vmem [shape: f32[1,128], index: 7, kind: input, shape index: {}]
  %s8 = inlined_call_operand.vmem [shape: bf16[64,1], index: 8, kind: input, shape index: {}]
  %s9 = inlined_call_operand.vmem [shape: bf16[64,1], index: 9, kind: input, shape index: {}]
  %s10 = inlined_call_operand.hbm [shape: f32[4,32,128], index: 10, kind: output, shape index: {}]
  %s11 = sld [smem:[#allocation0]]
  $region89: #{tpu_custom_call.1} parent=0
    _
  %s13 = ssub.s32 1, %s11
  %s14 = scalar_select 0, %s13, %s11
  $region1: #{tpu_custom_call.1} parent=0
    #allocation5 [shape = 'u8[32768]{0}', space=vmem, size = 0x8000, scoped, tag = 'input window, operand 0']
    #allocation6 [shape = 's32[2]{0}', space=sflag, size = 0x8, scoped, tag = 'scoped memory for tpu_custom_call.1']
    #allocation7 [shape = 's32[2]{0}', space=sflag, size = 0x8, scoped, tag = 'scoped memory for tpu_custom_call.1']
    #allocation8 [shape = 'u8[16384]{0}', space=vmem, size = 0x4000, scoped, tag = 'input window, operand 2, single buffered']
    #allocation9 [shape = 's32[1]{0}', space=sflag, size = 0x4, scoped, tag = 'scoped memory for tpu_custom_call.1']
    #allocation10 [shape = 'u8[16384]{0}', space=vmem, size = 0x4000, scoped, tag = 'input window, operand 3, single buffered']
    #allocation11 [shape = 'u8[49152]{0}', space=vmem, size = 0xc000, scoped, tag = 'input window, operand 4, single buffered']
    #allocation12 [shape = 's32[1]{0}', space=sflag, size = 0x4, scoped, tag = 'scoped memory for tpu_custom_call.1']
    #allocation13 [shape = 'u8[32768]{0}', space=vmem, size = 0x8000, scoped, tag = 'output window, operand 0']
    %15 = vsyncpa [#allocation6], 0
    %s16 = scalar_lea.sflag [#allocation6], 1
    %17 = vsyncpa %s16, 0
    %18 = vsyncpa [#allocation9], 0
    %19 = vsyncpa [#allocation12], 0
    %20 = vsyncpa [#allocation7], 0
    %s21 = scalar_lea.sflag [#allocation7], 1
    %22 = vsyncpa %s21, 0
    loop: start=0, step=1, limit=6
    $region2: #{tpu_custom_call.1} parent=1 // loop_pre_header
      _
    $region3: #{tpu_custom_call.1} parent=1 // loop_header
      %s24 = sphi 0, %s28
      %p25 = scmp.ge.s32.totalorder %s24, 6
      %s34 = sphi 0, %s36
      %s37 = sphi 0, %s34
      %s38 = sphi 0, %s37
      %s54 = sphi 0, %s38
      %s58 = sphi 0, %s58
      %s60 = sphi 0, %s58
      %s61 = sphi 0, %s60
      %s75 = sphi 0, %s61
      %s79 = sphi 0, %s79
      %s81 = sphi 0, %s79
      %s82 = sphi 0, %s81
      %s96 = sphi 0, %s82
      %s100 = sphi 0, %s100
      %s102 = sphi 0, %s100
      %s103 = sphi 0, %s102
      %s117 = sphi 0, %s103
      %s121 = sphi 0, %s121
      %s123 = sphi 0, %s121
      %s124 = sphi 0, %s123
      %s138 = sphi 0, %s124
      %s142 = sphi 0, %s142
      %s144 = sphi 0, %s142
      %s145 = sphi 0, %s144
      %s159 = sphi 0, %s145
      %s163 = sphi 0, %s163
      %s165 = sphi 0, %s163
      %s166 = sphi 0, %s165
      %s180 = sphi 0, %s166
      %s184 = sphi 0, %s184
      %s186 = sphi 0, %s184
      %s187 = sphi 0, %s186
      %s201 = sphi 0, %s187
      %s205 = sphi 0, %s205
      %s207 = sphi 0, %s205
      %s208 = sphi 0, %s207
      %s222 = sphi 0, %s208
      %s226 = sphi 0, %s226
      %s228 = sphi 0, %s226
      %s229 = sphi 0, %s228
      %s243 = sphi 0, %s229
      %s249 = sphi 0, %s251
      %s252 = sphi 0, %s249
      %s253 = sphi 0, %s252
      %s269 = sphi 0, %s253
    $region4: #{tpu_custom_call.1} parent=1 // loop_header_branch
      %27 = sbr.rel (%p25) target = $region8
    $region5: #{tpu_custom_call.1} parent=1 // loop_body
      %s29 = ssub.s32 %s24, 1
      %s30 = ssub.s32 %s24, 2
      %s31 = sadd.s32 %s24, 1
      %s32 = ssub.s32 %s24, %s31
      %p33 = scmp.eq.s32.totalorder %s32, 0
      %s35 = sadd.s32 %s34, 1
      %s36 = scalar_select %p33, %s34, %s35
      %p39 = pneg %p33
      %p40 = scmp.eq.s32.totalorder %s24, 3
      %p41 = por %p39, %p40
      %p42 = scmp.ne.s32.totalorder %s34, %s37
      %p43 = scmp.eq.s32.totalorder %s24, 0
      %p44 = por %p42, %p43
      %p45 = scmp.ne.s32.totalorder %s34, %s37
      %p46 = scmp.eq.s32.totalorder %s29, 3
      %p47 = por %p45, %p46
      %p48 = scmp.ne.s32.totalorder %s37, %s38
      %p49 = scmp.eq.s32.totalorder %s29, 0
      %p50 = por %p48, %p49
      %p51 = scmp.ne.s32.totalorder %s37, %s38
      %p52 = scmp.eq.s32.totalorder %s30, 3
      %p53 = por %p51, %p52
      %p55 = scmp.ne.s32.totalorder %s38, %s54
      %p56 = scmp.eq.s32.totalorder %s30, 0
      %p57 = por %p55, %p56
      %s59 = sadd.s32 %s58, 1
      %p62 = scmp.eq.s32.totalorder %s24, 3
      %p63 = scmp.ne.s32.totalorder %s58, %s60
      %p64 = scmp.eq.s32.totalorder %s24, 0
      %p65 = por %p63, %p64
      %p66 = scmp.ne.s32.totalorder %s58, %s60
      %p67 = scmp.eq.s32.totalorder %s29, 3
      %p68 = por %p66, %p67
      %p69 = scmp.ne.s32.totalorder %s60, %s61
      %p70 = scmp.eq.s32.totalorder %s29, 0
      %p71 = por %p69, %p70
      %p72 = scmp.ne.s32.totalorder %s60, %s61
      %p73 = scmp.eq.s32.totalorder %s30, 3
      %p74 = por %p72, %p73
      %p76 = scmp.ne.s32.totalorder %s61, %s75
      %p77 = scmp.eq.s32.totalorder %s30, 0
      %p78 = por %p76, %p77
      %s80 = sadd.s32 %s79, 1
      %p83 = scmp.eq.s32.totalorder %s24, 3
      %p84 = scmp.ne.s32.totalorder %s79, %s81
      %p85 = scmp.eq.s32.totalorder %s24, 0
      %p86 = por %p84, %p85
      %p87 = scmp.ne.s32.totalorder %s79, %s81
      %p88 = scmp.eq.s32.totalorder %s29, 3
      %p89 = por %p87, %p88
      %p90 = scmp.ne.s32.totalorder %s81, %s82
      %p91 = scmp.eq.s32.totalorder %s29, 0
      %p92 = por %p90, %p91
      %p93 = scmp.ne.s32.totalorder %s81, %s82
      %p94 = scmp.eq.s32.totalorder %s30, 3
      %p95 = por %p93, %p94
      %p97 = scmp.ne.s32.totalorder %s82, %s96
      %p98 = scmp.eq.s32.totalorder %s30, 0
      %p99 = por %p97, %p98
      %s101 = sadd.s32 %s100, 1
      %p104 = scmp.eq.s32.totalorder %s24, 3
      %p105 = scmp.ne.s32.totalorder %s100, %s102
      %p106 = scmp.eq.s32.totalorder %s24, 0
      %p107 = por %p105, %p106
      %p108 = scmp.ne.s32.totalorder %s100, %s102
      %p109 = scmp.eq.s32.totalorder %s29, 3
      %p110 = por %p108, %p109
      %p111 = scmp.ne.s32.totalorder %s102, %s103
      %p112 = scmp.eq.s32.totalorder %s29, 0
      %p113 = por %p111, %p112
      %p114 = scmp.ne.s32.totalorder %s102, %s103
      %p115 = scmp.eq.s32.totalorder %s30, 3
      %p116 = por %p114, %p115
      %p118 = scmp.ne.s32.totalorder %s103, %s117
      %p119 = scmp.eq.s32.totalorder %s30, 0
      %p120 = por %p118, %p119
      %s122 = sadd.s32 %s121, 1
      %p125 = scmp.eq.s32.totalorder %s24, 3
      %p126 = scmp.ne.s32.totalorder %s121, %s123
      %p127 = scmp.eq.s32.totalorder %s24, 0
      %p128 = por %p126, %p127
      %p129 = scmp.ne.s32.totalorder %s121, %s123
      %p130 = scmp.eq.s32.totalorder %s29, 3
      %p131 = por %p129, %p130
      %p132 = scmp.ne.s32.totalorder %s123, %s124
      %p133 = scmp.eq.s32.totalorder %s29, 0
      %p134 = por %p132, %p133
      %p135 = scmp.ne.s32.totalorder %s123, %s124
      %p136 = scmp.eq.s32.totalorder %s30, 3
      %p137 = por %p135, %p136
      %p139 = scmp.ne.s32.totalorder %s124, %s138
      %p140 = scmp.eq.s32.totalorder %s30, 0
      %p141 = por %p139, %p140
      %s143 = sadd.s32 %s142, 1
      %p146 = scmp.eq.s32.totalorder %s24, 3
      %p147 = scmp.ne.s32.totalorder %s142, %s144
      %p148 = scmp.eq.s32.totalorder %s24, 0
      %p149 = por %p147, %p148
      %p150 = scmp.ne.s32.totalorder %s142, %s144
      %p151 = scmp.eq.s32.totalorder %s29, 3
      %p152 = por %p150, %p151
      %p153 = scmp.ne.s32.totalorder %s144, %s145
      %p154 = scmp.eq.s32.totalorder %s29, 0
      %p155 = por %p153, %p154
      %p156 = scmp.ne.s32.totalorder %s144, %s145
      %p157 = scmp.eq.s32.totalorder %s30, 3
      %p158 = por %p156, %p157
      %p160 = scmp.ne.s32.totalorder %s145, %s159
      %p161 = scmp.eq.s32.totalorder %s30, 0
      %p162 = por %p160, %p161
      %s164 = sadd.s32 %s163, 1
      %p167 = scmp.eq.s32.totalorder %s24, 3
      %p168 = scmp.ne.s32.totalorder %s163, %s165
      %p169 = scmp.eq.s32.totalorder %s24, 0
      %p170 = por %p168, %p169
      %p171 = scmp.ne.s32.totalorder %s163, %s165
      %p172 = scmp.eq.s32.totalorder %s29, 3
      %p173 = por %p171, %p172
      %p174 = scmp.ne.s32.totalorder %s165, %s166
      %p175 = scmp.eq.s32.totalorder %s29, 0
      %p176 = por %p174, %p175
      %p177 = scmp.ne.s32.totalorder %s165, %s166
      %p178 = scmp.eq.s32.totalorder %s30, 3
      %p179 = por %p177, %p178
      %p181 = scmp.ne.s32.totalorder %s166, %s180
      %p182 = scmp.eq.s32.totalorder %s30, 0
      %p183 = por %p181, %p182
      %s185 = sadd.s32 %s184, 1
      %p188 = scmp.eq.s32.totalorder %s24, 3
      %p189 = scmp.ne.s32.totalorder %s184, %s186
      %p190 = scmp.eq.s32.totalorder %s24, 0
      %p191 = por %p189, %p190
      %p192 = scmp.ne.s32.totalorder %s184, %s186
      %p193 = scmp.eq.s32.totalorder %s29, 3
      %p194 = por %p192, %p193
      %p195 = scmp.ne.s32.totalorder %s186, %s187
      %p196 = scmp.eq.s32.totalorder %s29, 0
      %p197 = por %p195, %p196
      %p198 = scmp.ne.s32.totalorder %s186, %s187
      %p199 = scmp.eq.s32.totalorder %s30, 3
      %p200 = por %p198, %p199
      %p202 = scmp.ne.s32.totalorder %s187, %s201
      %p203 = scmp.eq.s32.totalorder %s30, 0
      %p204 = por %p202, %p203
      %s206 = sadd.s32 %s205, 1
      %p209 = scmp.eq.s32.totalorder %s24, 3
      %p210 = scmp.ne.s32.totalorder %s205, %s207
      %p211 = scmp.eq.s32.totalorder %s24, 0
      %p212 = por %p210, %p211
      %p213 = scmp.ne.s32.totalorder %s205, %s207
      %p214 = scmp.eq.s32.totalorder %s29, 3
      %p215 = por %p213, %p214
      %p216 = scmp.ne.s32.totalorder %s207, %s208
      %p217 = scmp.eq.s32.totalorder %s29, 0
      %p218 = por %p216, %p217
      %p219 = scmp.ne.s32.totalorder %s207, %s208
      %p220 = scmp.eq.s32.totalorder %s30, 3
      %p221 = por %p219, %p220
      %p223 = scmp.ne.s32.totalorder %s208, %s222
      %p224 = scmp.eq.s32.totalorder %s30, 0
      %p225 = por %p223, %p224
      %s227 = sadd.s32 %s226, 1
      %p230 = scmp.eq.s32.totalorder %s24, 3
      %p231 = scmp.ne.s32.totalorder %s226, %s228
      %p232 = scmp.eq.s32.totalorder %s24, 0
      %p233 = por %p231, %p232
      %p234 = scmp.ne.s32.totalorder %s226, %s228
      %p235 = scmp.eq.s32.totalorder %s29, 3
      %p236 = por %p234, %p235
      %p237 = scmp.ne.s32.totalorder %s228, %s229
      %p238 = scmp.eq.s32.totalorder %s29, 0
      %p239 = por %p237, %p238
      %p240 = scmp.ne.s32.totalorder %s228, %s229
      %p241 = scmp.eq.s32.totalorder %s30, 3
      %p242 = por %p240, %p241
      %p244 = scmp.ne.s32.totalorder %s229, %s243
      %p245 = scmp.eq.s32.totalorder %s30, 0
      %p246 = por %p244, %p245
      %s247 = ssub.s32 %s24, %s31
      %p248 = scmp.eq.s32.totalorder %s247, 0
      %s250 = sadd.s32 %s249, 1
      %s251 = scalar_select %p248, %s249, %s250
      %p254 = pneg %p248
      %p255 = scmp.eq.s32.totalorder %s24, 3
      %p256 = por %p254, %p255
      %p257 = scmp.ne.s32.totalorder %s249, %s252
      %p258 = scmp.eq.s32.totalorder %s24, 0
      %p259 = por %p257, %p258
      %p260 = scmp.ne.s32.totalorder %s249, %s252
      %p261 = scmp.eq.s32.totalorder %s29, 3
      %p262 = por %p260, %p261
      %p263 = scmp.ne.s32.totalorder %s252, %s253
      %p264 = scmp.eq.s32.totalorder %s29, 0
      %p265 = por %p263, %p264
      %p266 = scmp.ne.s32.totalorder %s252, %s253
      %p267 = scmp.eq.s32.totalorder %s30, 3
      %p268 = por %p266, %p267
      %p270 = scmp.ne.s32.totalorder %s253, %s269
      %p271 = scmp.eq.s32.totalorder %s30, 0
      %p272 = por %p270, %p271
      %p273 = scmp.le.s32.totalorder 1, %s24
      %p274 = scmp.lt.s32.totalorder %s24, 5
      %p275 = pnand %p273, %p274
      %p276 = pneg %p275
      // Predicated region
      $region9: #{tpu_custom_call.1} parent=5 // pred_check
        _
      $region10: #{tpu_custom_call.1} parent=5 // pred_check_branch
        %278 = sbr.rel (%p275) target = $region12
      $region11: #{tpu_custom_call.1} parent=5 // pred_region
        %s279 = ssub.s32 %s24, 1
        // Predicated region
        $region13: #{tpu_custom_call.1} parent=11 // pred_check
          %p280 = pneg %p71
        $region14: #{tpu_custom_call.1} parent=11 // pred_check_branch
          %282 = sbr.rel (%p280) target = $region16
        $region15: #{tpu_custom_call.1} parent=11 // pred_region
          _
        $region16: #{tpu_custom_call.1} parent=11 // pred_fallthru
          _
        // Predicated region
        $region17: #{tpu_custom_call.1} parent=11 // pred_check
          %p283 = pneg %p92
        $region18: #{tpu_custom_call.1} parent=11 // pred_check_branch
          %285 = sbr.rel (%p283) target = $region20
        $region19: #{tpu_custom_call.1} parent=11 // pred_region
          %s287 = ssub.s32 512, 512
          %288 = vsyncadd [#allocation9], %s287
          %s289 = sshll.u32 [#allocation8], 4
          %s290 = int_to_ptr.vmem [resolvable:$true] %s289
          %295 = dma.hbm_to_vmem [thread:$0]  %s2, 512, %s290, [#allocation9], 64, 64, 4
        $region20: #{tpu_custom_call.1} parent=11 // pred_fallthru
          _
        // Predicated region
        $region21: #{tpu_custom_call.1} parent=11 // pred_check
          %p296 = pneg %p113
        $region22: #{tpu_custom_call.1} parent=11 // pred_check_branch
          %298 = sbr.rel (%p296) target = $region24
        $region23: #{tpu_custom_call.1} parent=11 // pred_region
          %s300 = ssub.s32 512, 512
          %301 = vsyncadd [#allocation9], %s300
          %s302 = sshll.u32 [#allocation10], 4
          %s303 = int_to_ptr.vmem [resolvable:$true] %s302
          %308 = dma.hbm_to_vmem [thread:$0]  %s3, 512, %s303, [#allocation9], 64, 64, 4
        $region24: #{tpu_custom_call.1} parent=11 // pred_fallthru
          _
        // Predicated region
        $region25: #{tpu_custom_call.1} parent=11 // pred_check
          %p309 = pneg %p134
        $region26: #{tpu_custom_call.1} parent=11 // pred_check_branch
          %311 = sbr.rel (%p309) target = $region28
        $region27: #{tpu_custom_call.1} parent=11 // pred_region
          %s313 = ssub.s32 1536, 1536
          %314 = vsyncadd [#allocation12], %s313
          %s315 = sshll.u32 [#allocation11], 4
          %s316 = int_to_ptr.vmem [resolvable:$true] %s315
          %321 = dma.hbm_to_vmem [thread:$0]  %s4, 1536, %s316, [#allocation12], 64, 64, 4
        $region28: #{tpu_custom_call.1} parent=11 // pred_fallthru
          _
        // Predicated region
        $region29: #{tpu_custom_call.1} parent=11 // pred_check
          %p322 = pneg %p155
        $region30: #{tpu_custom_call.1} parent=11 // pred_check_branch
          %324 = sbr.rel (%p322) target = $region32
        $region31: #{tpu_custom_call.1} parent=11 // pred_region
          _
        $region32: #{tpu_custom_call.1} parent=11 // pred_fallthru
          _
        // Predicated region
        $region33: #{tpu_custom_call.1} parent=11 // pred_check
          %p325 = pneg %p176
        $region34: #{tpu_custom_call.1} parent=11 // pred_check_branch
          %327 = sbr.rel (%p325) target = $region36
        $region35: #{tpu_custom_call.1} parent=11 // pred_region
          _
        $region36: #{tpu_custom_call.1} parent=11 // pred_fallthru
          _
        // Predicated region
        $region37: #{tpu_custom_call.1} parent=11 // pred_check
          %p328 = pneg %p197
        $region38: #{tpu_custom_call.1} parent=11 // pred_check_branch
          %330 = sbr.rel (%p328) target = $region40
        $region39: #{tpu_custom_call.1} parent=11 // pred_region
          _
        $region40: #{tpu_custom_call.1} parent=11 // pred_fallthru
          _
        // Predicated region
        $region41: #{tpu_custom_call.1} parent=11 // pred_check
          %p331 = pneg %p218
        $region42: #{tpu_custom_call.1} parent=11 // pred_check_branch
          %333 = sbr.rel (%p331) target = $region44
        $region43: #{tpu_custom_call.1} parent=11 // pred_region
          _
        $region44: #{tpu_custom_call.1} parent=11 // pred_fallthru
          _
        // Predicated region
        $region45: #{tpu_custom_call.1} parent=11 // pred_check
          %p334 = pneg %p239
        $region46: #{tpu_custom_call.1} parent=11 // pred_check_branch
          %336 = sbr.rel (%p334) target = $region48
        $region47: #{tpu_custom_call.1} parent=11 // pred_region
          _
        $region48: #{tpu_custom_call.1} parent=11 // pred_fallthru
          _
      $region12: #{tpu_custom_call.1} parent=5 // pred_fallthru
        _
      %p337 = scmp.lt.s32.totalorder %s24, 4
      // Predicated region
      $region49: #{tpu_custom_call.1} parent=5 // pred_check
        %p338 = pneg %p337
      $region50: #{tpu_custom_call.1} parent=5 // pred_check_branch
        %340 = sbr.rel (%p338) target = $region52
      $region51: #{tpu_custom_call.1} parent=5 // pred_region
        // Predicated region
        $region53: #{tpu_custom_call.1} parent=51 // pred_check
          %p341 = pneg %p44
        $region54: #{tpu_custom_call.1} parent=51 // pred_check_branch
          %343 = sbr.rel (%p341) target = $region56
        $region55: #{tpu_custom_call.1} parent=51 // pred_region
          %s344 = sand.u32 %s34, 1
          %s345 = scalar_lea.sflag [#allocation6], %s344
          %s346 = sand.u32 %s34, 1
          %s347 = smul.addr %s346, 32
          %s348 = scalar_lea.vmem [#allocation5], %s347
          %s350 = ssub.s32 512, 512
          %351 = vsyncadd %s345, %s350
          %s352 = smul.addr %s24, 8
          %s353 = smul.addr %s352, 64
          %s354 = scalar_lea.hbm %s0, %s353
          %s355 = sshll.u32 %s348, 4
          %s356 = int_to_ptr.vmem [resolvable:$true] %s355
          %361 = dma.hbm_to_vmem [thread:$0]  %s354, 512, %s356, %s345, 64, 64, 4
        $region56: #{tpu_custom_call.1} parent=51 // pred_fallthru
          _
      $region52: #{tpu_custom_call.1} parent=5 // pred_fallthru
        _
      %p362 = scmp.le.s32.totalorder 1, %s24
      %p363 = scmp.lt.s32.totalorder %s24, 5
      %p364 = pnand %p362, %p363
      %p365 = pneg %p364
      // Predicated region
      $region57: #{tpu_custom_call.1} parent=5 // pred_check
        _
      $region58: #{tpu_custom_call.1} parent=5 // pred_check_branch
        %367 = sbr.rel (%p364) target = $region60
      $region59: #{tpu_custom_call.1} parent=5 // pred_region
        %s368 = ssub.s32 %s24, 1
        %s369 = sand.u32 %s37, 1
        %s370 = scalar_lea.sflag [#allocation6], %s369
        %s371 = sand.u32 %s37, 1
        %s372 = smul.addr %s371, 32
        %s373 = scalar_lea.vmem [#allocation5], %s372
        // Predicated region
        $region61: #{tpu_custom_call.1} parent=59 // pred_check
          %p374 = pneg %p50
        $region62: #{tpu_custom_call.1} parent=59 // pred_check_branch
          %376 = sbr.rel (%p374) target = $region64
        $region63: #{tpu_custom_call.1} parent=59 // pred_region
          %377 = dma.done %s370, 512
        $region64: #{tpu_custom_call.1} parent=59 // pred_fallthru
          _
        // Predicated region
        $region65: #{tpu_custom_call.1} parent=59 // pred_check
          %p378 = pneg %p92
        $region66: #{tpu_custom_call.1} parent=59 // pred_check_branch
          %380 = sbr.rel (%p378) target = $region68
        $region67: #{tpu_custom_call.1} parent=59 // pred_region
          %381 = dma.done [#allocation9], 512
        $region68: #{tpu_custom_call.1} parent=59 // pred_fallthru
          _
        // Predicated region
        $region69: #{tpu_custom_call.1} parent=59 // pred_check
          %p382 = pneg %p113
        $region70: #{tpu_custom_call.1} parent=59 // pred_check_branch
          %384 = sbr.rel (%p382) target = $region72
        $region71: #{tpu_custom_call.1} parent=59 // pred_region
          %385 = dma.done [#allocation9], 512
        $region72: #{tpu_custom_call.1} parent=59 // pred_fallthru
          _
        // Predicated region
        $region73: #{tpu_custom_call.1} parent=59 // pred_check
          %p386 = pneg %p134
        $region74: #{tpu_custom_call.1} parent=59 // pred_check_branch
          %388 = sbr.rel (%p386) target = $region76
        $region75: #{tpu_custom_call.1} parent=59 // pred_region
          %389 = dma.done [#allocation12], 1536
        $region76: #{tpu_custom_call.1} parent=59 // pred_fallthru
          _
        %s390 = sand.u32 %s37, 1
        %s391 = scalar_lea.sflag [#allocation6], %s390
        %s392 = sand.u32 %s37, 1
        %s393 = smul.addr %s392, 32
        %s394 = scalar_lea.vmem [#allocation5], %s393
        %p395 = pneg %p50
        %p396 = pneg %p47
        %p397 = pneg %p71
        %p398 = pneg %p68
        %p399 = pneg %p92
        %p400 = pneg %p89
        %p401 = pneg %p113
        %p402 = pneg %p110
        %p403 = pneg %p134
        %p404 = pneg %p131
        %p405 = pneg %p155
        %p406 = pneg %p152
        %p407 = pneg %p176
        %p408 = pneg %p173
        %p409 = pneg %p197
        %p410 = pneg %p194
        %p411 = pneg %p218
        %p412 = pneg %p215
        %p413 = pneg %p239
        %p414 = pneg %p236
        %p415 = pneg %p265
        %p416 = pneg %p262
        %s417 = sand.u32 %s252, 1
        %s418 = scalar_lea.sflag [#allocation7], %s417
        %s419 = sand.u32 %s252, 1
        %s420 = smul.addr %s419, 32
        %s421 = scalar_lea.vmem [#allocation13], %s420
        %v423 = vld [vmem:[%s373] sm:$0xf]
        %v424 = vld [vmem:[%s373 + $0x4] sm:$0xf]
        %v425 = vld [vmem:[%s373 + $0x8] sm:$0xf]
        %v426 = vld [vmem:[%s373 + $0xc] sm:$0xf]
        %v427 = vld [vmem:[%s373 + $0x10] sm:$0xf]
        %v428 = vld [vmem:[%s373 + $0x14] sm:$0xf]
        %v429 = vld [vmem:[%s373 + $0x18] sm:$0xf]
        %v430 = vld [vmem:[%s373 + $0x1c] sm:$0xf]
        %v431 = vld [vmem:[%s8] sm:$0xf]
        %v432 = vld [vmem:[%s8 + $0x4] sm:$0xf]
        %v433 = vld [vmem:[%s8 + $0x8] sm:$0xf]
        %v434 = vld [vmem:[%s8 + $0xc] sm:$0xf]
        %v435 = vld [vmem:[%s8 + $0x10] sm:$0xf]
        %v436 = vld [vmem:[%s8 + $0x14] sm:$0xf]
        %v437 = vld [vmem:[%s8 + $0x18] sm:$0xf]
        %v438 = vld [vmem:[%s8 + $0x1c] sm:$0xf]
        %v439 = vld [vmem:[%s9] sm:$0xf]
        %v440 = vld [vmem:[%s9 + $0x4] sm:$0xf]
        %v441 = vld [vmem:[%s9 + $0x8] sm:$0xf]
        %v442 = vld [vmem:[%s9 + $0xc] sm:$0xf]
        %v443 = vld [vmem:[%s9 + $0x10] sm:$0xf]
        %v444 = vld [vmem:[%s9 + $0x14] sm:$0xf]
        %v445 = vld [vmem:[%s9 + $0x18] sm:$0xf]
        %v446 = vld [vmem:[%s9 + $0x1c] sm:$0xf]
        %v447 = vld [vmem:[%s1] sm:$0xff]
        %v448 = vld [vmem:[%s1 + $0x8] sm:$0xff]
        %v449 = vld [vmem:[%s1 + $0x10] sm:$0xff]
        %v450 = vld [vmem:[%s1 + $0x18] sm:$0xff]
        %v451 = vld [vmem:[%s1 + $0x20] sm:$0xff]
        %v452 = vld [vmem:[%s1 + $0x28] sm:$0xff]
        %v453 = vld [vmem:[%s1 + $0x30] sm:$0xff]
        %v454 = vld [vmem:[%s1 + $0x38] sm:$0xff]
        %v463 = vunpack.c.l.b16 %v423
        %v464 = vunpack.c.l.b16 %v424
        %v465 = vunpack.c.l.b16 %v425
        %v466 = vunpack.c.l.b16 %v426
        %v467 = vunpack.c.l.b16 %v427
        %v468 = vunpack.c.l.b16 %v428
        %v469 = vunpack.c.l.b16 %v429
        %v470 = vunpack.c.l.b16 %v430
        %v471 = vpack.c.b16 %v464, %v463
        %v472 = vpack.c.b16 %v466, %v465
        %v473 = vpack.c.b16 %v468, %v467
        %v474 = vpack.c.b16 %v470, %v469
        %v483 = vunpack.c.l.b16 %v447
        %v484 = vunpack.c.h.b16 %v447
        %v485 = vunpack.c.l.b16 %v448
        %v486 = vunpack.c.h.b16 %v448
        %v487 = vunpack.c.l.b16 %v449
        %v488 = vunpack.c.h.b16 %v449
        %v489 = vunpack.c.l.b16 %v450
        %v490 = vunpack.c.h.b16 %v450
        %v491 = vunpack.c.l.b16 %v451
        %v492 = vunpack.c.h.b16 %v451
        %v493 = vunpack.c.l.b16 %v452
        %v494 = vunpack.c.h.b16 %v452
        %v495 = vunpack.c.l.b16 %v453
        %v496 = vunpack.c.h.b16 %v453
        %v497 = vunpack.c.l.b16 %v454
        %v498 = vunpack.c.h.b16 %v454
        %v499 = vpack.c.b16 %v485, %v483
        %v500 = vpack.c.b16 %v486, %v484
        %v501 = vpack.c.b16 %v489, %v487
        %v502 = vpack.c.b16 %v490, %v488
        %v503 = vpack.c.b16 %v493, %v491
        %v504 = vpack.c.b16 %v494, %v492
        %v505 = vpack.c.b16 %v497, %v495
        %v506 = vpack.c.b16 %v498, %v496
        %vm515 = vcmask 523264
        %v517 = vsel %vm515, %v471, 0
        %v520 = vsel %vm515, %v472, 0
        %v523 = vsel %vm515, %v473, 0
        %v526 = vsel %vm515, %v474, 0
        %528 = vmatprep.subr.bf16.mxu0 %v500
        %529 = vmatpush1.bf16.msra.mxu0 %v499
        %530 = vmatprep.subr.bf16.mxu0 %v502
        %531 = vmatpush1.bf16.msra.mxu0 %v501
        %532 = vmatprep.subr.bf16.mxu0 %v504
        %533 = vmatpush1.bf16.msra.mxu0 %v503
        %534 = vmatprep.subr.bf16.mxu0 %v506
        %535 = vmatpush1.bf16.msra.mxu0 %v505
        %536 = vmatprep.subr.bf16.mxu0 0
        %537 = vmatpush1.bf16.msra.mxu0 0
        %538 = vmatprep.subr.bf16.mxu0 0
        %539 = vmatpush1.bf16.msra.mxu0 0
        %540 = vmatprep.subr.bf16.mxu0 0
        %541 = vmatpush1.bf16.msra.mxu0 0
        %542 = vmatprep.subr.bf16.mxu0 0
        %543 = vmatpush1.bf16.msra.mxu0 0
        %544 = vmatprep.subr.bf16.mxu0 0
        %545 = vmatpush1.bf16.msra.mxu0 0
        %546 = vmatprep.subr.bf16.mxu0 0
        %547 = vmatpush1.bf16.msra.mxu0 0
        %548 = vmatprep.subr.bf16.mxu0 0
        %549 = vmatpush1.bf16.msra.mxu0 0
        %550 = vmatprep.subr.bf16.mxu0 0
        %551 = vmatpush1.bf16.msra.mxu0 0
        %552 = vmatprep.subr.bf16.mxu0 0
        %553 = vmatpush1.bf16.msra.mxu0 0
        %554 = vmatprep.subr.bf16.mxu0 0
        %555 = vmatpush1.bf16.msra.mxu0 0
        %556 = vmatprep.subr.bf16.mxu0 0
        %557 = vmatpush1.bf16.msra.mxu0 0
        %558 = vmatprep.subr.bf16.mxu0 0
        %559 = vmatpush1.bf16.msra.mxu0 0
        %560 = vmatprep.mubr.bf16.mxu0 0
        %561 = vmatmul.mubr.bf16.gmra.mrb[0].mxu0 %v517
        %v562 = vpop.f32.mrb[0].mxu0
        %v563 = vadd.f32 0.0, %v562
        %v564 = vpop.f32.mrb[0].mxu0
        %v565 = vadd.f32 0.0, %v564
        %v566 = vpop.f32.mrb[0].mxu0
        %v567 = vadd.f32 0.0, %v566
        %v568 = vpop.f32.mrb[0].mxu0
        %v569 = vadd.f32 0.0, %v568
        %570 = vmatprep.mubr.bf16.mxu0 0
        %571 = vmatmul.mubr.bf16.gmra.mrb[0].mxu0 %v520
        %v572 = vpop.f32.mrb[0].mxu0
        %v573 = vadd.f32 0.0, %v572
        %v574 = vpop.f32.mrb[0].mxu0
        %v575 = vadd.f32 0.0, %v574
        %v576 = vpop.f32.mrb[0].mxu0
        %v577 = vadd.f32 0.0, %v576
        %v578 = vpop.f32.mrb[0].mxu0
        %v579 = vadd.f32 0.0, %v578
        %580 = vmatprep.mubr.bf16.mxu0 0
        %581 = vmatmul.mubr.bf16.gmra.mrb[0].mxu0 %v523
        %v582 = vpop.f32.mrb[0].mxu0
        %v583 = vadd.f32 0.0, %v582
        %v584 = vpop.f32.mrb[0].mxu0
        %v585 = vadd.f32 0.0, %v584
        %v586 = vpop.f32.mrb[0].mxu0
        %v587 = vadd.f32 0.0, %v586
        %v588 = vpop.f32.mrb[0].mxu0
        %v589 = vadd.f32 0.0, %v588
        %590 = vmatprep.mubr.bf16.mxu0 0
        %591 = vmatmul.mubr.bf16.gmra.mrb[0].mxu0 %v526
        %v592 = vpop.f32.mrb[0].mxu0
        %v593 = vadd.f32 0.0, %v592
        %v594 = vpop.f32.mrb[0].mxu0
        %v595 = vadd.f32 0.0, %v594
        %v596 = vpop.f32.mrb[0].mxu0
        %v597 = vadd.f32 0.0, %v596
        %v598 = vpop.f32.mrb[0].mxu0
        %v599 = vadd.f32 0.0, %v598
        %600 = vdwg.mxu0
        %v601 = vld [vmem:[%s5] sm:$0x1]
        %v603 = vlaneseq
        %v604 = vshrl.u32 %v603, 7
        %v605 = vsub.s32 0, %v604
        %v606 = vrot.slane %v601, %v605
        %v608 = vadd.f32 %v563, %v606
        %v609 = vadd.f32 %v567, %v606
        %v610 = vadd.f32 %v573, %v606
        %v611 = vadd.f32 %v577, %v606
        %v612 = vadd.f32 %v583, %v606
        %v613 = vadd.f32 %v587, %v606
        %v614 = vadd.f32 %v593, %v606
        %v615 = vadd.f32 %v597, %v606
        %616 = vst [vmem:[#allocation3] sm:$0xff] %v608
        %617 = vst [vmem:[#allocation3 + $0x8] sm:$0xff] %v609
        %618 = vst [vmem:[#allocation3 + $0x10] sm:$0xff] %v610
        %619 = vst [vmem:[#allocation3 + $0x18] sm:$0xff] %v611
        %620 = vst [vmem:[#allocation3 + $0x20] sm:$0xff] %v612
        %621 = vst [vmem:[#allocation3 + $0x28] sm:$0xff] %v613
        %622 = vst [vmem:[#allocation3 + $0x30] sm:$0xff] %v614
        %623 = vst [vmem:[#allocation3 + $0x38] sm:$0xff] %v615
        %v624 = vld [vmem:[%s6] sm:$0x1]
        %v626 = vlaneseq
        %v627 = vshrl.u32 %v626, 7
        %v628 = vsub.s32 0, %v627
        %v629 = vrot.slane %v624, %v628
        %v631 = vadd.f32 %v565, %v629
        %v632 = vadd.f32 %v569, %v629
        %v633 = vadd.f32 %v575, %v629
        %v634 = vadd.f32 %v579, %v629
        %v635 = vadd.f32 %v585, %v629
        %v636 = vadd.f32 %v589, %v629
        %v637 = vadd.f32 %v595, %v629
        %v638 = vadd.f32 %v599, %v629
        %639 = vst.msk [vmem:[#allocation2] sm:$0xff] %vm515, %v631
        %640 = vst.msk [vmem:[#allocation2 + $0x8] sm:$0xff] %vm515, %v632
        %641 = vst.msk [vmem:[#allocation2 + $0x10] sm:$0xff] %vm515, %v633
        %642 = vst.msk [vmem:[#allocation2 + $0x18] sm:$0xff] %vm515, %v634
        %643 = vst.msk [vmem:[#allocation2 + $0x20] sm:$0xff] %vm515, %v635
        %644 = vst.msk [vmem:[#allocation2 + $0x28] sm:$0xff] %vm515, %v636
        %645 = vst.msk [vmem:[#allocation2 + $0x30] sm:$0xff] %vm515, %v637
        %646 = vst.msk [vmem:[#allocation2 + $0x38] sm:$0xff] %vm515, %v638
        %648 = vset.pattern.permute.xlu0 0
        %649 = vperm.xlu0 %648, %v431
        %v650 = vpop.permute.xlu0 %649
        %v653 = vunpack.c.l.s4 839922192
        %v654 = vunpack.c.0.s8 %v653
        %v655 = vlaneseq
        %v656 = vshrl.u32 %v655, 7
        %v657 = vsub.s32 %v654, %v656
        %v658 = vrot.slane %v650, %v657
        %660 = vset.pattern.permute.xlu0 0
        %661 = vperm.xlu0 %660, %v432
        %v662 = vpop.permute.xlu0 %661
        %v665 = vunpack.c.l.s4 839922192
        %v666 = vunpack.c.0.s8 %v665
        %v667 = vlaneseq
        %v668 = vshrl.u32 %v667, 7
        %v669 = vsub.s32 %v666, %v668
        %v670 = vrot.slane %v662, %v669
        %672 = vset.pattern.permute.xlu0 0
        %673 = vperm.xlu0 %672, %v433
        %v674 = vpop.permute.xlu0 %673
        %v677 = vunpack.c.l.s4 839922192
        %v678 = vunpack.c.0.s8 %v677
        %v679 = vlaneseq
        %v680 = vshrl.u32 %v679, 7
        %v681 = vsub.s32 %v678, %v680
        %v682 = vrot.slane %v674, %v681
        %684 = vset.pattern.permute.xlu0 0
        %685 = vperm.xlu0 %684, %v434
        %v686 = vpop.permute.xlu0 %685
        %v689 = vunpack.c.l.s4 839922192
        %v690 = vunpack.c.0.s8 %v689
        %v691 = vlaneseq
        %v692 = vshrl.u32 %v691, 7
        %v693 = vsub.s32 %v690, %v692
        %v694 = vrot.slane %v686, %v693
        %696 = vset.pattern.permute.xlu0 0
        %697 = vperm.xlu0 %696, %v435
        %v698 = vpop.permute.xlu0 %697
        %v701 = vunpack.c.l.s4 839922192
        %v702 = vunpack.c.0.s8 %v701
        %v703 = vlaneseq
        %v704 = vshrl.u32 %v703, 7
        %v705 = vsub.s32 %v702, %v704
        %v706 = vrot.slane %v698, %v705
        %708 = vset.pattern.permute.xlu0 0
        %709 = vperm.xlu0 %708, %v436
        %v710 = vpop.permute.xlu0 %709
        %v713 = vunpack.c.l.s4 839922192
        %v714 = vunpack.c.0.s8 %v713
        %v715 = vlaneseq
        %v716 = vshrl.u32 %v715, 7
        %v717 = vsub.s32 %v714, %v716
        %v718 = vrot.slane %v710, %v717
        %720 = vset.pattern.permute.xlu0 0
        %721 = vperm.xlu0 %720, %v437
        %v722 = vpop.permute.xlu0 %721
        %v725 = vunpack.c.l.s4 839922192
        %v726 = vunpack.c.0.s8 %v725
        %v727 = vlaneseq
        %v728 = vshrl.u32 %v727, 7
        %v729 = vsub.s32 %v726, %v728
        %v730 = vrot.slane %v722, %v729
        %732 = vset.pattern.permute.xlu0 0
        %733 = vperm.xlu0 %732, %v438
        %v734 = vpop.permute.xlu0 %733
        %v737 = vunpack.c.l.s4 839922192
        %v738 = vunpack.c.0.s8 %v737
        %v739 = vlaneseq
        %v740 = vshrl.u32 %v739, 7
        %v741 = vsub.s32 %v738, %v740
        %v742 = vrot.slane %v734, %v741
        %v743 = vmul.bf16 %v423, %v658
        %v744 = vmul.bf16 %v424, %v670
        %v745 = vmul.bf16 %v425, %v682
        %v746 = vmul.bf16 %v426, %v694
        %v747 = vmul.bf16 %v427, %v706
        %v748 = vmul.bf16 %v428, %v718
        %v749 = vmul.bf16 %v429, %v730
        %v750 = vmul.bf16 %v430, %v742
        %752 = vset.pattern.permute.xlu0 0
        %753 = vperm.xlu0 %752, %v439
        %v754 = vpop.permute.xlu0 %753
        %v757 = vunpack.c.l.s4 839922192
        %v758 = vunpack.c.0.s8 %v757
        %v759 = vlaneseq
        %v760 = vshrl.u32 %v759, 7
        %v761 = vsub.s32 %v758, %v760
        %v762 = vrot.slane %v754, %v761
        %764 = vset.pattern.permute.xlu0 0
        %765 = vperm.xlu0 %764, %v440
        %v766 = vpop.permute.xlu0 %765
        %v769 = vunpack.c.l.s4 839922192
        %v770 = vunpack.c.0.s8 %v769
        %v771 = vlaneseq
        %v772 = vshrl.u32 %v771, 7
        %v773 = vsub.s32 %v770, %v772
        %v774 = vrot.slane %v766, %v773
        %776 = vset.pattern.permute.xlu0 0
        %777 = vperm.xlu0 %776, %v441
        %v778 = vpop.permute.xlu0 %777
        %v781 = vunpack.c.l.s4 839922192
        %v782 = vunpack.c.0.s8 %v781
        %v783 = vlaneseq
        %v784 = vshrl.u32 %v783, 7
        %v785 = vsub.s32 %v782, %v784
        %v786 = vrot.slane %v778, %v785
        %788 = vset.pattern.permute.xlu0 0
        %789 = vperm.xlu0 %788, %v442
        %v790 = vpop.permute.xlu0 %789
        %v793 = vunpack.c.l.s4 839922192
        %v794 = vunpack.c.0.s8 %v793
        %v795 = vlaneseq
        %v796 = vshrl.u32 %v795, 7
        %v797 = vsub.s32 %v794, %v796
        %v798 = vrot.slane %v790, %v797
        %800 = vset.pattern.permute.xlu0 0
        %801 = vperm.xlu0 %800, %v443
        %v802 = vpop.permute.xlu0 %801
        %v805 = vunpack.c.l.s4 839922192
        %v806 = vunpack.c.0.s8 %v805
        %v807 = vlaneseq
        %v808 = vshrl.u32 %v807, 7
        %v809 = vsub.s32 %v806, %v808
        %v810 = vrot.slane %v802, %v809
        %812 = vset.pattern.permute.xlu0 0
        %813 = vperm.xlu0 %812, %v444
        %v814 = vpop.permute.xlu0 %813
        %v817 = vunpack.c.l.s4 839922192
        %v818 = vunpack.c.0.s8 %v817
        %v819 = vlaneseq
        %v820 = vshrl.u32 %v819, 7
        %v821 = vsub.s32 %v818, %v820
        %v822 = vrot.slane %v814, %v821
        %824 = vset.pattern.permute.xlu0 0
        %825 = vperm.xlu0 %824, %v445
        %v826 = vpop.permute.xlu0 %825
        %v829 = vunpack.c.l.s4 839922192
        %v830 = vunpack.c.0.s8 %v829
        %v831 = vlaneseq
        %v832 = vshrl.u32 %v831, 7
        %v833 = vsub.s32 %v830, %v832
        %v834 = vrot.slane %v826, %v833
        %836 = vset.pattern.permute.xlu0 0
        %837 = vperm.xlu0 %836, %v446
        %v838 = vpop.permute.xlu0 %837
        %v841 = vunpack.c.l.s4 839922192
        %v842 = vunpack.c.0.s8 %v841
        %v843 = vlaneseq
        %v844 = vshrl.u32 %v843, 7
        %v845 = vsub.s32 %v842, %v844
        %v846 = vrot.slane %v838, %v845
        %v847 = vmul.bf16 %v423, %v762
        %v848 = vmul.bf16 %v424, %v774
        %v849 = vmul.bf16 %v425, %v786
        %v850 = vmul.bf16 %v426, %v798
        %v851 = vmul.bf16 %v427, %v810
        %v852 = vmul.bf16 %v428, %v822
        %v853 = vmul.bf16 %v429, %v834
        %v854 = vmul.bf16 %v430, %v846
        %v855 = vld [vmem:[#allocation2 + $0x1] sm:$0xff]
        %v856 = vld [vmem:[#allocation2 + $0x9] sm:$0xff]
        %v857 = vld [vmem:[#allocation2 + $0x11] sm:$0xff]
        %v858 = vld [vmem:[#allocation2 + $0x19] sm:$0xff]
        %v859 = vld [vmem:[#allocation2 + $0x21] sm:$0xff]
        %v860 = vld [vmem:[#allocation2 + $0x29] sm:$0xff]
        %v861 = vld [vmem:[#allocation2 + $0x31] sm:$0xff]
        %v862 = vld [vmem:[#allocation2 + $0x39] sm:$0x7f]
        %v863 = vld [vmem:[#allocation8] sm:$0xf]
        %v864 = vld [vmem:[#allocation8 + $0x4] sm:$0xf]
        %v865 = vld [vmem:[#allocation8 + $0x8] sm:$0xf]
        %v866 = vld [vmem:[#allocation8 + $0xc] sm:$0xf]
        %v867 = vld [vmem:[#allocation8 + $0x10] sm:$0xf]
        %v868 = vld [vmem:[#allocation8 + $0x14] sm:$0xf]
        %v869 = vld [vmem:[#allocation8 + $0x18] sm:$0xf]
        %v870 = vld [vmem:[#allocation8 + $0x1c] sm:$0xf]
        %v879 = vunpack.c.l.b16 %v743
        %v880 = vunpack.c.l.b16 %v744
        %v881 = vunpack.c.l.b16 %v745
        %v882 = vunpack.c.l.b16 %v746
        %v883 = vunpack.c.l.b16 %v747
        %v884 = vunpack.c.l.b16 %v748
        %v885 = vunpack.c.l.b16 %v749
        %v886 = vunpack.c.l.b16 %v750
        %v887 = vpack.c.b16 %v880, %v879
        %v888 = vpack.c.b16 %v882, %v881
        %v889 = vpack.c.b16 %v884, %v883
        %v890 = vpack.c.b16 %v886, %v885
        %v899 = vunpack.c.l.b16 %v863
        %v900 = vunpack.c.l.b16 %v864
        %v901 = vunpack.c.l.b16 %v865
        %v902 = vunpack.c.l.b16 %v866
        %v903 = vunpack.c.l.b16 %v867
        %v904 = vunpack.c.l.b16 %v868
        %v905 = vunpack.c.l.b16 %v869
        %v906 = vunpack.c.l.b16 %v870
        %v907 = vpack.c.b16 %v900, %v899
        %v908 = vpack.c.b16 %v902, %v901
        %v909 = vpack.c.b16 %v904, %v903
        %v910 = vpack.c.b16 %v906, %v905
        %v916 = vsel %vm515, %v887, 0
        %v919 = vsel %vm515, %v888, 0
        %v922 = vsel %vm515, %v889, 0
        %v925 = vsel %vm515, %v890, 0
        %927 = vmatprep.subr.bf16.mxu0 0
        %928 = vmatpush1.bf16.msra.mxu0 %v907
        %929 = vmatprep.subr.bf16.mxu0 0
        %930 = vmatpush1.bf16.msra.mxu0 %v908
        %931 = vmatprep.subr.bf16.mxu0 0
        %932 = vmatpush1.bf16.msra.mxu0 %v909
        %933 = vmatprep.subr.bf16.mxu0 0
        %934 = vmatpush1.bf16.msra.mxu0 %v910
        %935 = vmatprep.subr.bf16.mxu0 0
        %936 = vmatpush1.bf16.msra.mxu0 0
        %937 = vmatprep.subr.bf16.mxu0 0
        %938 = vmatpush1.bf16.msra.mxu0 0
        %939 = vmatprep.subr.bf16.mxu0 0
        %940 = vmatpush1.bf16.msra.mxu0 0
        %941 = vmatprep.subr.bf16.mxu0 0
        %942 = vmatpush1.bf16.msra.mxu0 0
        %943 = vmatprep.subr.bf16.mxu0 0
        %944 = vmatpush1.bf16.msra.mxu0 0
        %945 = vmatprep.subr.bf16.mxu0 0
        %946 = vmatpush1.bf16.msra.mxu0 0
        %947 = vmatprep.subr.bf16.mxu0 0
        %948 = vmatpush1.bf16.msra.mxu0 0
        %949 = vmatprep.subr.bf16.mxu0 0
        %950 = vmatpush1.bf16.msra.mxu0 0
        %951 = vmatprep.subr.bf16.mxu0 0
        %952 = vmatpush1.bf16.msra.mxu0 0
        %953 = vmatprep.subr.bf16.mxu0 0
        %954 = vmatpush1.bf16.msra.mxu0 0
        %955 = vmatprep.subr.bf16.mxu0 0
        %956 = vmatpush1.bf16.msra.mxu0 0
        %957 = vmatprep.subr.bf16.mxu0 0
        %958 = vmatpush1.bf16.msra.mxu0 0
        %959 = vmatprep.mubr.bf16.mxu0 0
        %960 = vmatmul.mubr.bf16.gmra.mrb[0].mxu0 %v916
        %v961 = vpop.f32.mrb[0].mxu0
        %v962 = vadd.f32 0.0, %v961
        %v963 = vpop.f32.mrb[0].mxu0
        %v964 = vpop.f32.mrb[0].mxu0
        %v965 = vadd.f32 0.0, %v964
        %v966 = vpop.f32.mrb[0].mxu0
        %967 = vmatprep.mubr.bf16.mxu0 0
        %968 = vmatmul.mubr.bf16.gmra.mrb[0].mxu0 %v919
        %v969 = vpop.f32.mrb[0].mxu0
        %v970 = vadd.f32 0.0, %v969
        %v971 = vpop.f32.mrb[0].mxu0
        %v972 = vpop.f32.mrb[0].mxu0
        %v973 = vadd.f32 0.0, %v972
        %v974 = vpop.f32.mrb[0].mxu0
        %975 = vmatprep.mubr.bf16.mxu0 0
        %976 = vmatmul.mubr.bf16.gmra.mrb[0].mxu0 %v922
        %v977 = vpop.f32.mrb[0].mxu0
        %v978 = vadd.f32 0.0, %v977
        %v979 = vpop.f32.mrb[0].mxu0
        %v980 = vpop.f32.mrb[0].mxu0
        %v981 = vadd.f32 0.0, %v980
        %v982 = vpop.f32.mrb[0].mxu0
        %983 = vmatprep.mubr.bf16.mxu0 0
        %984 = vmatmul.mubr.bf16.gmra.mrb[0].mxu0 %v925
        %v985 = vpop.f32.mrb[0].mxu0
        %v986 = vadd.f32 0.0, %v985
        %v987 = vpop.f32.mrb[0].mxu0
        %v988 = vpop.f32.mrb[0].mxu0
        %v989 = vadd.f32 0.0, %v988
        %v990 = vpop.f32.mrb[0].mxu0
        %991 = vdwg.mxu0
        %v992 = vadd.f32 %v855, %v962
        %v993 = vadd.f32 %v856, %v965
        %v994 = vadd.f32 %v857, %v970
        %v995 = vadd.f32 %v858, %v973
        %v996 = vadd.f32 %v859, %v978
        %v997 = vadd.f32 %v860, %v981
        %v998 = vadd.f32 %v861, %v986
        %v999 = vadd.f32 %v862, %v989
        %1000 = vst.msk [vmem:[#allocation2 + $0x1] sm:$0xff] %vm515, %v992
        %1001 = vst.msk [vmem:[#allocation2 + $0x9] sm:$0xff] %vm515, %v993
        %1002 = vst.msk [vmem:[#allocation2 + $0x11] sm:$0xff] %vm515, %v994
        %1003 = vst.msk [vmem:[#allocation2 + $0x19] sm:$0xff] %vm515, %v995
        %1004 = vst.msk [vmem:[#allocation2 + $0x21] sm:$0xff] %vm515, %v996
        %1005 = vst.msk [vmem:[#allocation2 + $0x29] sm:$0xff] %vm515, %v997
        %1006 = vst.msk [vmem:[#allocation2 + $0x31] sm:$0xff] %vm515, %v998
        %vm1007 = vcmask 522240
        %1008 = vst.msk [vmem:[#allocation2 + $0x39] sm:$0x7f] %vm1007, %v999
        %v1009 = vld [vmem:[#allocation2] sm:$0xff]
        %v1010 = vld [vmem:[#allocation2 + $0x8] sm:$0xff]
        %v1011 = vld [vmem:[#allocation2 + $0x10] sm:$0xff]
        %v1012 = vld [vmem:[#allocation2 + $0x18] sm:$0xff]
        %v1013 = vld [vmem:[#allocation2 + $0x20] sm:$0xff]
        %v1014 = vld [vmem:[#allocation2 + $0x28] sm:$0xff]
        %v1015 = vld [vmem:[#allocation2 + $0x30] sm:$0xff]
        %v1016 = vld [vmem:[#allocation2 + $0x38] sm:$0x7f]
        %v1017 = vld [vmem:[#allocation10] sm:$0xf]
        %v1018 = vld [vmem:[#allocation10 + $0x4] sm:$0xf]
        %v1019 = vld [vmem:[#allocation10 + $0x8] sm:$0xf]
        %v1020 = vld [vmem:[#allocation10 + $0xc] sm:$0xf]
        %v1021 = vld [vmem:[#allocation10 + $0x10] sm:$0xf]
        %v1022 = vld [vmem:[#allocation10 + $0x14] sm:$0xf]
        %v1023 = vld [vmem:[#allocation10 + $0x18] sm:$0xf]
        %v1024 = vld [vmem:[#allocation10 + $0x1c] sm:$0xf]
        %v1033 = vunpack.c.l.b16 %v847
        %v1034 = vunpack.c.l.b16 %v848
        %v1035 = vunpack.c.l.b16 %v849
        %v1036 = vunpack.c.l.b16 %v850
        %v1037 = vunpack.c.l.b16 %v851
        %v1038 = vunpack.c.l.b16 %v852
        %v1039 = vunpack.c.l.b16 %v853
        %v1040 = vunpack.c.l.b16 %v854
        %v1041 = vpack.c.b16 %v1034, %v1033
        %v1042 = vpack.c.b16 %v1036, %v1035
        %v1043 = vpack.c.b16 %v1038, %v1037
        %v1044 = vpack.c.b16 %v1040, %v1039
        %vm1045 = vsmask.f32 7424
        %v1047 = vshrl.u32 %v1041, 16
        %v1049 = vshll.u32 %v1041, 16
        %v1051 = vrot.slane %v1049, 1
        %v1052 = vor.u32 %v1047, %v1051
        %v1054 = vshll.u32 %v1042, 16
        %v1056 = vrot.slane %v1054, 1
        %v1057 = vsel %vm1045, %v1052, %v1056
        %v1058 = vshrl.u32 %v1042, 16
        %v1060 = vor.u32 %v1058, %v1056
        %v1062 = vshll.u32 %v1043, 16
        %v1064 = vrot.slane %v1062, 1
        %v1065 = vsel %vm1045, %v1060, %v1064
        %v1066 = vshrl.u32 %v1043, 16
        %v1068 = vor.u32 %v1066, %v1064
        %v1070 = vshll.u32 %v1044, 16
        %v1072 = vrot.slane %v1070, 1
        %v1073 = vsel %vm1045, %v1068, %v1072
        %v1074 = vshrl.u32 %v1044, 16
        %v1076 = vor.u32 %v1074, %v1072
        %v1085 = vunpack.c.l.b16 %v1017
        %v1086 = vunpack.c.l.b16 %v1018
        %v1087 = vunpack.c.l.b16 %v1019
        %v1088 = vunpack.c.l.b16 %v1020
        %v1089 = vunpack.c.l.b16 %v1021
        %v1090 = vunpack.c.l.b16 %v1022
        %v1091 = vunpack.c.l.b16 %v1023
        %v1092 = vunpack.c.l.b16 %v1024
        %v1093 = vpack.c.b16 %v1086, %v1085
        %v1094 = vpack.c.b16 %v1088, %v1087
        %v1095 = vpack.c.b16 %v1090, %v1089
        %v1096 = vpack.c.b16 %v1092, %v1091
        %v1102 = vsel %vm515, %v1057, 0
        %v1105 = vsel %vm515, %v1065, 0
        %v1108 = vsel %vm515, %v1073, 0
        %v1111 = vsel %vm515, %v1076, 0
        %1113 = vmatprep.subr.bf16.mxu0 0
        %1114 = vmatpush1.bf16.msra.mxu0 %v1093
        %1115 = vmatprep.subr.bf16.mxu0 0
        %1116 = vmatpush1.bf16.msra.mxu0 %v1094
        %1117 = vmatprep.subr.bf16.mxu0 0
        %1118 = vmatpush1.bf16.msra.mxu0 %v1095
        %1119 = vmatprep.subr.bf16.mxu0 0
        %1120 = vmatpush1.bf16.msra.mxu0 %v1096
        %1121 = vmatprep.subr.bf16.mxu0 0
        %1122 = vmatpush1.bf16.msra.mxu0 0
        %1123 = vmatprep.subr.bf16.mxu0 0
        %1124 = vmatpush1.bf16.msra.mxu0 0
        %1125 = vmatprep.subr.bf16.mxu0 0
        %1126 = vmatpush1.bf16.msra.mxu0 0
        %1127 = vmatprep.subr.bf16.mxu0 0
        %1128 = vmatpush1.bf16.msra.mxu0 0
        %1129 = vmatprep.subr.bf16.mxu0 0
        %1130 = vmatpush1.bf16.msra.mxu0 0
        %1131 = vmatprep.subr.bf16.mxu0 0
        %1132 = vmatpush1.bf16.msra.mxu0 0
        %1133 = vmatprep.subr.bf16.mxu0 0
        %1134 = vmatpush1.bf16.msra.mxu0 0
        %1135 = vmatprep.subr.bf16.mxu0 0
        %1136 = vmatpush1.bf16.msra.mxu0 0
        %1137 = vmatprep.subr.bf16.mxu0 0
        %1138 = vmatpush1.bf16.msra.mxu0 0
        %1139 = vmatprep.subr.bf16.mxu0 0
        %1140 = vmatpush1.bf16.msra.mxu0 0
        %1141 = vmatprep.subr.bf16.mxu0 0
        %1142 = vmatpush1.bf16.msra.mxu0 0
        %1143 = vmatprep.subr.bf16.mxu0 0
        %1144 = vmatpush1.bf16.msra.mxu0 0
        %1145 = vmatprep.mubr.bf16.mxu0 0
        %1146 = vmatmul.mubr.bf16.gmra.mrb[0].mxu0 %v1102
        %v1147 = vpop.f32.mrb[0].mxu0
        %v1148 = vadd.f32 0.0, %v1147
        %v1149 = vpop.f32.mrb[0].mxu0
        %v1150 = vpop.f32.mrb[0].mxu0
        %v1151 = vadd.f32 0.0, %v1150
        %v1152 = vpop.f32.mrb[0].mxu0
        %1153 = vmatprep.mubr.bf16.mxu0 0
        %1154 = vmatmul.mubr.bf16.gmra.mrb[0].mxu0 %v1105
        %v1155 = vpop.f32.mrb[0].mxu0
        %v1156 = vadd.f32 0.0, %v1155
        %v1157 = vpop.f32.mrb[0].mxu0
        %v1158 = vpop.f32.mrb[0].mxu0
        %v1159 = vadd.f32 0.0, %v1158
        %v1160 = vpop.f32.mrb[0].mxu0
        %1161 = vmatprep.mubr.bf16.mxu0 0
        %1162 = vmatmul.mubr.bf16.gmra.mrb[0].mxu0 %v1108
        %v1163 = vpop.f32.mrb[0].mxu0
        %v1164 = vadd.f32 0.0, %v1163
        %v1165 = vpop.f32.mrb[0].mxu0
        %v1166 = vpop.f32.mrb[0].mxu0
        %v1167 = vadd.f32 0.0, %v1166
        %v1168 = vpop.f32.mrb[0].mxu0
        %1169 = vmatprep.mubr.bf16.mxu0 0
        %1170 = vmatmul.mubr.bf16.gmra.mrb[0].mxu0 %v1111
        %v1171 = vpop.f32.mrb[0].mxu0
        %v1172 = vadd.f32 0.0, %v1171
        %v1173 = vpop.f32.mrb[0].mxu0
        %v1174 = vpop.f32.mrb[0].mxu0
        %v1175 = vadd.f32 0.0, %v1174
        %v1176 = vpop.f32.mrb[0].mxu0
        %1177 = vdwg.mxu0
        %v1178 = vadd.f32 %v1009, %v1148
        %v1179 = vadd.f32 %v1010, %v1151
        %v1180 = vadd.f32 %v1011, %v1156
        %v1181 = vadd.f32 %v1012, %v1159
        %v1182 = vadd.f32 %v1013, %v1164
        %v1183 = vadd.f32 %v1014, %v1167
        %v1184 = vadd.f32 %v1015, %v1172
        %v1185 = vadd.f32 %v1016, %v1175
        %1186 = vst.msk [vmem:[#allocation2] sm:$0xff] %vm515, %v1178
        %1187 = vst.msk [vmem:[#allocation2 + $0x8] sm:$0xff] %vm515, %v1179
        %1188 = vst.msk [vmem:[#allocation2 + $0x10] sm:$0xff] %vm515, %v1180
        %1189 = vst.msk [vmem:[#allocation2 + $0x18] sm:$0xff] %vm515, %v1181
        %1190 = vst.msk [vmem:[#allocation2 + $0x20] sm:$0xff] %vm515, %v1182
        %1191 = vst.msk [vmem:[#allocation2 + $0x28] sm:$0xff] %vm515, %v1183
        %1192 = vst.msk [vmem:[#allocation2 + $0x30] sm:$0xff] %vm515, %v1184
        %1193 = vst.msk [vmem:[#allocation2 + $0x38] sm:$0x7f] %vm1007, %v1185
        %v1194 = vld [vmem:[#allocation2] sm:$0xff]
        %v1195 = vld [vmem:[#allocation2 + $0x8] sm:$0xff]
        %v1196 = vld [vmem:[#allocation2 + $0x10] sm:$0xff]
        %v1197 = vld [vmem:[#allocation2 + $0x18] sm:$0xff]
        %v1198 = vld [vmem:[#allocation2 + $0x20] sm:$0xff]
        %v1199 = vld [vmem:[#allocation2 + $0x28] sm:$0xff]
        %v1200 = vld [vmem:[#allocation2 + $0x30] sm:$0xff]
        %v1201 = vld [vmem:[#allocation2 + $0x38] sm:$0xff]
        %v1202 = vmax.f32 %v1194, 0.0
        %v1203 = vmax.f32 %v1195, 0.0
        %v1204 = vmax.f32 %v1196, 0.0
        %v1205 = vmax.f32 %v1197, 0.0
        %v1206 = vmax.f32 %v1198, 0.0
        %v1207 = vmax.f32 %v1199, 0.0
        %v1208 = vmax.f32 %v1200, 0.0
        %v1209 = vmax.f32 %v1201, 0.0
        %v1210 = vpack.c.bf16 %v1203, %v1202
        %v1211 = vpack.c.bf16 %v1205, %v1204
        %v1212 = vpack.c.bf16 %v1207, %v1206
        %v1213 = vpack.c.bf16 %v1209, %v1208
        %s1214 = scalar_lea.vmem [#allocation11], 32
        %v1215 = vld [vmem:[%s1214] sm:$0xf]
        %v1216 = vld [vmem:[%s1214 + $0x4] sm:$0xf]
        %v1217 = vld [vmem:[%s1214 + $0x8] sm:$0xf]
        %v1218 = vld [vmem:[%s1214 + $0xc] sm:$0xf]
        %v1219 = vld [vmem:[%s1214 + $0x10] sm:$0xf]
        %v1220 = vld [vmem:[%s1214 + $0x14] sm:$0xf]
        %v1221 = vld [vmem:[%s1214 + $0x18] sm:$0xf]
        %v1222 = vld [vmem:[%s1214 + $0x1c] sm:$0xf]
        %v1223 = vld [vmem:[%s7] sm:$0x1]
        %v1225 = vlaneseq
        %v1226 = vshrl.u32 %v1225, 7
        %v1227 = vsub.s32 0, %v1226
        %v1228 = vrot.slane %v1223, %v1227
        %v1238 = vunpack.c.l.b16 %v1215
        %v1239 = vunpack.c.l.b16 %v1216
        %v1240 = vunpack.c.l.b16 %v1217
        %v1241 = vunpack.c.l.b16 %v1218
        %v1242 = vunpack.c.l.b16 %v1219
        %v1243 = vunpack.c.l.b16 %v1220
        %v1244 = vunpack.c.l.b16 %v1221
        %v1245 = vunpack.c.l.b16 %v1222
        %v1246 = vpack.c.b16 %v1239, %v1238
        %v1247 = vpack.c.b16 %v1241, %v1240
        %v1248 = vpack.c.b16 %v1243, %v1242
        %v1249 = vpack.c.b16 %v1245, %v1244
        %v1255 = vsel %vm515, %v1210, 0
        %v1258 = vsel %vm515, %v1211, 0
        %v1261 = vsel %vm515, %v1212, 0
        %v1264 = vsel %vm515, %v1213, 0
        %1266 = vmatprep.subr.bf16.mxu0 0
        %1267 = vmatpush1.bf16.msra.mxu0 %v1246
        %1268 = vmatprep.subr.bf16.mxu0 0
        %1269 = vmatpush1.bf16.msra.mxu0 %v1247
        %1270 = vmatprep.subr.bf16.mxu0 0
        %1271 = vmatpush1.bf16.msra.mxu0 %v1248
        %1272 = vmatprep.subr.bf16.mxu0 0
        %1273 = vmatpush1.bf16.msra.mxu0 %v1249
        %1274 = vmatprep.subr.bf16.mxu0 0
        %1275 = vmatpush1.bf16.msra.mxu0 0
        %1276 = vmatprep.subr.bf16.mxu0 0
        %1277 = vmatpush1.bf16.msra.mxu0 0
        %1278 = vmatprep.subr.bf16.mxu0 0
        %1279 = vmatpush1.bf16.msra.mxu0 0
        %1280 = vmatprep.subr.bf16.mxu0 0
        %1281 = vmatpush1.bf16.msra.mxu0 0
        %1282 = vmatprep.subr.bf16.mxu0 0
        %1283 = vmatpush1.bf16.msra.mxu0 0
        %1284 = vmatprep.subr.bf16.mxu0 0
        %1285 = vmatpush1.bf16.msra.mxu0 0
        %1286 = vmatprep.subr.bf16.mxu0 0
        %1287 = vmatpush1.bf16.msra.mxu0 0
        %1288 = vmatprep.subr.bf16.mxu0 0
        %1289 = vmatpush1.bf16.msra.mxu0 0
        %1290 = vmatprep.subr.bf16.mxu0 0
        %1291 = vmatpush1.bf16.msra.mxu0 0
        %1292 = vmatprep.subr.bf16.mxu0 0
        %1293 = vmatpush1.bf16.msra.mxu0 0
        %1294 = vmatprep.subr.bf16.mxu0 0
        %1295 = vmatpush1.bf16.msra.mxu0 0
        %1296 = vmatprep.subr.bf16.mxu0 0
        %1297 = vmatpush1.bf16.msra.mxu0 0
        %1298 = vmatprep.mubr.bf16.mxu0 0
        %1299 = vmatmul.mubr.bf16.gmra.mrb[0].mxu0 %v1255
        %v1300 = vpop.f32.mrb[0].mxu0
        %v1301 = vadd.f32 %v1228, %v1300
        %v1302 = vpop.f32.mrb[0].mxu0
        %v1303 = vpop.f32.mrb[0].mxu0
        %v1304 = vadd.f32 %v1228, %v1303
        %v1305 = vpop.f32.mrb[0].mxu0
        %1306 = vmatprep.mubr.bf16.mxu0 0
        %1307 = vmatmul.mubr.bf16.gmra.mrb[0].mxu0 %v1258
        %v1308 = vpop.f32.mrb[0].mxu0
        %v1309 = vadd.f32 %v1228, %v1308
        %v1310 = vpop.f32.mrb[0].mxu0
        %v1311 = vpop.f32.mrb[0].mxu0
        %v1312 = vadd.f32 %v1228, %v1311
        %v1313 = vpop.f32.mrb[0].mxu0
        %1314 = vmatprep.mubr.bf16.mxu0 0
        %1315 = vmatmul.mubr.bf16.gmra.mrb[0].mxu0 %v1261
        %v1316 = vpop.f32.mrb[0].mxu0
        %v1317 = vadd.f32 %v1228, %v1316
        %v1318 = vpop.f32.mrb[0].mxu0
        %v1319 = vpop.f32.mrb[0].mxu0
        %v1320 = vadd.f32 %v1228, %v1319
        %v1321 = vpop.f32.mrb[0].mxu0
        %1322 = vmatprep.mubr.bf16.mxu0 0
        %1323 = vmatmul.mubr.bf16.gmra.mrb[0].mxu0 %v1264
        %v1324 = vpop.f32.mrb[0].mxu0
        %v1325 = vadd.f32 %v1228, %v1324
        %v1326 = vpop.f32.mrb[0].mxu0
        %v1327 = vpop.f32.mrb[0].mxu0
        %v1328 = vadd.f32 %v1228, %v1327
        %v1329 = vpop.f32.mrb[0].mxu0
        %1330 = vdwg.mxu0
        %1331 = vst [vmem:[#allocation4] sm:$0xff] %v1301
        %1332 = vst [vmem:[#allocation4 + $0x8] sm:$0xff] %v1304
        %1333 = vst [vmem:[#allocation4 + $0x10] sm:$0xff] %v1309
        %1334 = vst [vmem:[#allocation4 + $0x18] sm:$0xff] %v1312
        %1335 = vst [vmem:[#allocation4 + $0x20] sm:$0xff] %v1317
        %1336 = vst [vmem:[#allocation4 + $0x28] sm:$0xff] %v1320
        %1337 = vst [vmem:[#allocation4 + $0x30] sm:$0xff] %v1325
        %1338 = vst [vmem:[#allocation4 + $0x38] sm:$0xff] %v1328
        %v1347 = vunpack.c.l.b16 %v658
        %v1348 = vunpack.c.l.b16 %v670
        %v1349 = vunpack.c.l.b16 %v682
        %v1350 = vunpack.c.l.b16 %v694
        %v1351 = vunpack.c.l.b16 %v706
        %v1352 = vunpack.c.l.b16 %v718
        %v1353 = vunpack.c.l.b16 %v730
        %v1354 = vunpack.c.l.b16 %v742
        %v1355 = vpack.c.b16 %v1348, %v1347
        %v1356 = vpack.c.b16 %v1350, %v1349
        %v1357 = vpack.c.b16 %v1352, %v1351
        %v1358 = vpack.c.b16 %v1354, %v1353
        %v1363 = vmul.bf16 %v1210, %v1355
        %v1364 = vmul.bf16 %v1211, %v1356
        %v1365 = vmul.bf16 %v1212, %v1357
        %v1366 = vmul.bf16 %v1213, %v1358
        %v1375 = vunpack.c.l.b16 %v762
        %v1376 = vunpack.c.l.b16 %v774
        %v1377 = vunpack.c.l.b16 %v786
        %v1378 = vunpack.c.l.b16 %v798
        %v1379 = vunpack.c.l.b16 %v810
        %v1380 = vunpack.c.l.b16 %v822
        %v1381 = vunpack.c.l.b16 %v834
        %v1382 = vunpack.c.l.b16 %v846
        %v1383 = vpack.c.b16 %v1376, %v1375
        %v1384 = vpack.c.b16 %v1378, %v1377
        %v1385 = vpack.c.b16 %v1380, %v1379
        %v1386 = vpack.c.b16 %v1382, %v1381
        %v1391 = vmul.bf16 %v1210, %v1383
        %v1392 = vmul.bf16 %v1211, %v1384
        %v1393 = vmul.bf16 %v1212, %v1385
        %v1394 = vmul.bf16 %v1213, %v1386
        %v1395 = vld [vmem:[#allocation4 + $0x1] sm:$0xff]
        %v1396 = vld [vmem:[#allocation4 + $0x9] sm:$0xff]
        %v1397 = vld [vmem:[#allocation4 + $0x11] sm:$0xff]
        %v1398 = vld [vmem:[#allocation4 + $0x19] sm:$0xff]
        %v1399 = vld [vmem:[#allocation4 + $0x21] sm:$0xff]
        %v1400 = vld [vmem:[#allocation4 + $0x29] sm:$0xff]
        %v1401 = vld [vmem:[#allocation4 + $0x31] sm:$0xff]
        %v1402 = vld [vmem:[#allocation4 + $0x39] sm:$0x7f]
        %v1403 = vld [vmem:[#allocation11] sm:$0xf]
        %v1404 = vld [vmem:[#allocation11 + $0x4] sm:$0xf]
        %v1405 = vld [vmem:[#allocation11 + $0x8] sm:$0xf]
        %v1406 = vld [vmem:[#allocation11 + $0xc] sm:$0xf]
        %v1407 = vld [vmem:[#allocation11 + $0x10] sm:$0xf]
        %v1408 = vld [vmem:[#allocation11 + $0x14] sm:$0xf]
        %v1409 = vld [vmem:[#allocation11 + $0x18] sm:$0xf]
        %v1410 = vld [vmem:[#allocation11 + $0x1c] sm:$0xf]
        %v1419 = vunpack.c.l.b16 %v1403
        %v1420 = vunpack.c.l.b16 %v1404
        %v1421 = vunpack.c.l.b16 %v1405
        %v1422 = vunpack.c.l.b16 %v1406
        %v1423 = vunpack.c.l.b16 %v1407
        %v1424 = vunpack.c.l.b16 %v1408
        %v1425 = vunpack.c.l.b16 %v1409
        %v1426 = vunpack.c.l.b16 %v1410
        %v1427 = vpack.c.b16 %v1420, %v1419
        %v1428 = vpack.c.b16 %v1422, %v1421
        %v1429 = vpack.c.b16 %v1424, %v1423
        %v1430 = vpack.c.b16 %v1426, %v1425
        %v1436 = vsel %vm515, %v1363, 0
        %v1439 = vsel %vm515, %v1364, 0
        %v1442 = vsel %vm515, %v1365, 0
        %v1445 = vsel %vm515, %v1366, 0
        %1447 = vmatprep.subr.bf16.mxu0 0
        %1448 = vmatpush1.bf16.msra.mxu0 %v1427
        %1449 = vmatprep.subr.bf16.mxu0 0
        %1450 = vmatpush1.bf16.msra.mxu0 %v1428
        %1451 = vmatprep.subr.bf16.mxu0 0
        %1452 = vmatpush1.bf16.msra.mxu0 %v1429
        %1453 = vmatprep.subr.bf16.mxu0 0
        %1454 = vmatpush1.bf16.msra.mxu0 %v1430
        %1455 = vmatprep.subr.bf16.mxu0 0
        %1456 = vmatpush1.bf16.msra.mxu0 0
        %1457 = vmatprep.subr.bf16.mxu0 0
        %1458 = vmatpush1.bf16.msra.mxu0 0
        %1459 = vmatprep.subr.bf16.mxu0 0
        %1460 = vmatpush1.bf16.msra.mxu0 0
        %1461 = vmatprep.subr.bf16.mxu0 0
        %1462 = vmatpush1.bf16.msra.mxu0 0
        %1463 = vmatprep.subr.bf16.mxu0 0
        %1464 = vmatpush1.bf16.msra.mxu0 0
        %1465 = vmatprep.subr.bf16.mxu0 0
        %1466 = vmatpush1.bf16.msra.mxu0 0
        %1467 = vmatprep.subr.bf16.mxu0 0
        %1468 = vmatpush1.bf16.msra.mxu0 0
        %1469 = vmatprep.subr.bf16.mxu0 0
        %1470 = vmatpush1.bf16.msra.mxu0 0
        %1471 = vmatprep.subr.bf16.mxu0 0
        %1472 = vmatpush1.bf16.msra.mxu0 0
        %1473 = vmatprep.subr.bf16.mxu0 0
        %1474 = vmatpush1.bf16.msra.mxu0 0
        %1475 = vmatprep.subr.bf16.mxu0 0
        %1476 = vmatpush1.bf16.msra.mxu0 0
        %1477 = vmatprep.subr.bf16.mxu0 0
        %1478 = vmatpush1.bf16.msra.mxu0 0
        %1479 = vmatprep.mubr.bf16.mxu0 0
        %1480 = vmatmul.mubr.bf16.gmra.mrb[0].mxu0 %v1436
        %v1481 = vpop.f32.mrb[0].mxu0
        %v1482 = vadd.f32 0.0, %v1481
        %v1483 = vpop.f32.mrb[0].mxu0
        %v1484 = vpop.f32.mrb[0].mxu0
        %v1485 = vadd.f32 0.0, %v1484
        %v1486 = vpop.f32.mrb[0].mxu0
        %1487 = vmatprep.mubr.bf16.mxu0 0
        %1488 = vmatmul.mubr.bf16.gmra.mrb[0].mxu0 %v1439
        %v1489 = vpop.f32.mrb[0].mxu0
        %v1490 = vadd.f32 0.0, %v1489
        %v1491 = vpop.f32.mrb[0].mxu0
        %v1492 = vpop.f32.mrb[0].mxu0
        %v1493 = vadd.f32 0.0, %v1492
        %v1494 = vpop.f32.mrb[0].mxu0
        %1495 = vmatprep.mubr.bf16.mxu0 0
        %1496 = vmatmul.mubr.bf16.gmra.mrb[0].mxu0 %v1442
        %v1497 = vpop.f32.mrb[0].mxu0
        %v1498 = vadd.f32 0.0, %v1497
        %v1499 = vpop.f32.mrb[0].mxu0
        %v1500 = vpop.f32.mrb[0].mxu0
        %v1501 = vadd.f32 0.0, %v1500
        %v1502 = vpop.f32.mrb[0].mxu0
        %1503 = vmatprep.mubr.bf16.mxu0 0
        %1504 = vmatmul.mubr.bf16.gmra.mrb[0].mxu0 %v1445
        %v1505 = vpop.f32.mrb[0].mxu0
        %v1506 = vadd.f32 0.0, %v1505
        %v1507 = vpop.f32.mrb[0].mxu0
        %v1508 = vpop.f32.mrb[0].mxu0
        %v1509 = vadd.f32 0.0, %v1508
        %v1510 = vpop.f32.mrb[0].mxu0
        %1511 = vdwg.mxu0
        %v1512 = vadd.f32 %v1395, %v1482
        %v1513 = vadd.f32 %v1396, %v1485
        %v1514 = vadd.f32 %v1397, %v1490
        %v1515 = vadd.f32 %v1398, %v1493
        %v1516 = vadd.f32 %v1399, %v1498
        %v1517 = vadd.f32 %v1400, %v1501
        %v1518 = vadd.f32 %v1401, %v1506
        %v1519 = vadd.f32 %v1402, %v1509
        %1520 = vst [vmem:[#allocation4 + $0x1] sm:$0xff] %v1512
        %1521 = vst [vmem:[#allocation4 + $0x9] sm:$0xff] %v1513
        %1522 = vst [vmem:[#allocation4 + $0x11] sm:$0xff] %v1514
        %1523 = vst [vmem:[#allocation4 + $0x19] sm:$0xff] %v1515
        %1524 = vst [vmem:[#allocation4 + $0x21] sm:$0xff] %v1516
        %1525 = vst [vmem:[#allocation4 + $0x29] sm:$0xff] %v1517
        %1526 = vst [vmem:[#allocation4 + $0x31] sm:$0xff] %v1518
        %1527 = vst [vmem:[#allocation4 + $0x39] sm:$0x7f] %v1519
        %v1528 = vld [vmem:[#allocation4] sm:$0xff]
        %v1529 = vld [vmem:[#allocation4 + $0x8] sm:$0xff]
        %v1530 = vld [vmem:[#allocation4 + $0x10] sm:$0xff]
        %v1531 = vld [vmem:[#allocation4 + $0x18] sm:$0xff]
        %v1532 = vld [vmem:[#allocation4 + $0x20] sm:$0xff]
        %v1533 = vld [vmem:[#allocation4 + $0x28] sm:$0xff]
        %v1534 = vld [vmem:[#allocation4 + $0x30] sm:$0xff]
        %v1535 = vld [vmem:[#allocation4 + $0x38] sm:$0x7f]
        %s1536 = scalar_lea.vmem [#allocation11], 64
        %v1537 = vld [vmem:[%s1536] sm:$0xf]
        %v1538 = vld [vmem:[%s1536 + $0x4] sm:$0xf]
        %v1539 = vld [vmem:[%s1536 + $0x8] sm:$0xf]
        %v1540 = vld [vmem:[%s1536 + $0xc] sm:$0xf]
        %v1541 = vld [vmem:[%s1536 + $0x10] sm:$0xf]
        %v1542 = vld [vmem:[%s1536 + $0x14] sm:$0xf]
        %v1543 = vld [vmem:[%s1536 + $0x18] sm:$0xf]
        %v1544 = vld [vmem:[%s1536 + $0x1c] sm:$0xf]
        %v1546 = vshrl.u32 %v1391, 16
        %v1548 = vshll.u32 %v1391, 16
        %v1550 = vrot.slane %v1548, 1
        %v1551 = vor.u32 %v1546, %v1550
        %v1553 = vshll.u32 %v1392, 16
        %v1555 = vrot.slane %v1553, 1
        %v1556 = vsel %vm1045, %v1551, %v1555
        %v1557 = vshrl.u32 %v1392, 16
        %v1559 = vor.u32 %v1557, %v1555
        %v1561 = vshll.u32 %v1393, 16
        %v1563 = vrot.slane %v1561, 1
        %v1564 = vsel %vm1045, %v1559, %v1563
        %v1565 = vshrl.u32 %v1393, 16
        %v1567 = vor.u32 %v1565, %v1563
        %v1569 = vshll.u32 %v1394, 16
        %v1571 = vrot.slane %v1569, 1
        %v1572 = vsel %vm1045, %v1567, %v1571
        %v1573 = vshrl.u32 %v1394, 16
        %v1575 = vor.u32 %v1573, %v1571
        %v1584 = vunpack.c.l.b16 %v1537
        %v1585 = vunpack.c.l.b16 %v1538
        %v1586 = vunpack.c.l.b16 %v1539
        %v1587 = vunpack.c.l.b16 %v1540
        %v1588 = vunpack.c.l.b16 %v1541
        %v1589 = vunpack.c.l.b16 %v1542
        %v1590 = vunpack.c.l.b16 %v1543
        %v1591 = vunpack.c.l.b16 %v1544
        %v1592 = vpack.c.b16 %v1585, %v1584
        %v1593 = vpack.c.b16 %v1587, %v1586
        %v1594 = vpack.c.b16 %v1589, %v1588
        %v1595 = vpack.c.b16 %v1591, %v1590
        %v1601 = vsel %vm515, %v1556, 0
        %v1604 = vsel %vm515, %v1564, 0
        %v1607 = vsel %vm515, %v1572, 0
        %v1610 = vsel %vm515, %v1575, 0
        %1612 = vmatprep.subr.bf16.mxu0 0
        %1613 = vmatpush1.bf16.msra.mxu0 %v1592
        %1614 = vmatprep.subr.bf16.mxu0 0
        %1615 = vmatpush1.bf16.msra.mxu0 %v1593
        %1616 = vmatprep.subr.bf16.mxu0 0
        %1617 = vmatpush1.bf16.msra.mxu0 %v1594
        %1618 = vmatprep.subr.bf16.mxu0 0
        %1619 = vmatpush1.bf16.msra.mxu0 %v1595
        %1620 = vmatprep.subr.bf16.mxu0 0
        %1621 = vmatpush1.bf16.msra.mxu0 0
        %1622 = vmatprep.subr.bf16.mxu0 0
        %1623 = vmatpush1.bf16.msra.mxu0 0
        %1624 = vmatprep.subr.bf16.mxu0 0
        %1625 = vmatpush1.bf16.msra.mxu0 0
        %1626 = vmatprep.subr.bf16.mxu0 0
        %1627 = vmatpush1.bf16.msra.mxu0 0
        %1628 = vmatprep.subr.bf16.mxu0 0
        %1629 = vmatpush1.bf16.msra.mxu0 0
        %1630 = vmatprep.subr.bf16.mxu0 0
        %1631 = vmatpush1.bf16.msra.mxu0 0
        %1632 = vmatprep.subr.bf16.mxu0 0
        %1633 = vmatpush1.bf16.msra.mxu0 0
        %1634 = vmatprep.subr.bf16.mxu0 0
        %1635 = vmatpush1.bf16.msra.mxu0 0
        %1636 = vmatprep.subr.bf16.mxu0 0
        %1637 = vmatpush1.bf16.msra.mxu0 0
        %1638 = vmatprep.subr.bf16.mxu0 0
        %1639 = vmatpush1.bf16.msra.mxu0 0
        %1640 = vmatprep.subr.bf16.mxu0 0
        %1641 = vmatpush1.bf16.msra.mxu0 0
        %1642 = vmatprep.subr.bf16.mxu0 0
        %1643 = vmatpush1.bf16.msra.mxu0 0
        %1644 = vmatprep.mubr.bf16.mxu0 0
        %1645 = vmatmul.mubr.bf16.gmra.mrb[0].mxu0 %v1601
        %v1646 = vpop.f32.mrb[0].mxu0
        %v1647 = vadd.f32 0.0, %v1646
        %v1648 = vpop.f32.mrb[0].mxu0
        %v1649 = vpop.f32.mrb[0].mxu0
        %v1650 = vadd.f32 0.0, %v1649
        %v1651 = vpop.f32.mrb[0].mxu0
        %1652 = vmatprep.mubr.bf16.mxu0 0
        %1653 = vmatmul.mubr.bf16.gmra.mrb[0].mxu0 %v1604
        %v1654 = vpop.f32.mrb[0].mxu0
        %v1655 = vadd.f32 0.0, %v1654
        %v1656 = vpop.f32.mrb[0].mxu0
        %v1657 = vpop.f32.mrb[0].mxu0
        %v1658 = vadd.f32 0.0, %v1657
        %v1659 = vpop.f32.mrb[0].mxu0
        %1660 = vmatprep.mubr.bf16.mxu0 0
        %1661 = vmatmul.mubr.bf16.gmra.mrb[0].mxu0 %v1607
        %v1662 = vpop.f32.mrb[0].mxu0
        %v1663 = vadd.f32 0.0, %v1662
        %v1664 = vpop.f32.mrb[0].mxu0
        %v1665 = vpop.f32.mrb[0].mxu0
        %v1666 = vadd.f32 0.0, %v1665
        %v1667 = vpop.f32.mrb[0].mxu0
        %1668 = vmatprep.mubr.bf16.mxu0 0
        %1669 = vmatmul.mubr.bf16.gmra.mrb[0].mxu0 %v1610
        %v1670 = vpop.f32.mrb[0].mxu0
        %v1671 = vadd.f32 0.0, %v1670
        %v1672 = vpop.f32.mrb[0].mxu0
        %v1673 = vpop.f32.mrb[0].mxu0
        %v1674 = vadd.f32 0.0, %v1673
        %v1675 = vpop.f32.mrb[0].mxu0
        %1676 = vdwg.mxu0
        %v1677 = vadd.f32 %v1528, %v1647
        %v1678 = vadd.f32 %v1529, %v1650
        %v1679 = vadd.f32 %v1530, %v1655
        %v1680 = vadd.f32 %v1531, %v1658
        %v1681 = vadd.f32 %v1532, %v1663
        %v1682 = vadd.f32 %v1533, %v1666
        %v1683 = vadd.f32 %v1534, %v1671
        %v1684 = vadd.f32 %v1535, %v1674
        %1685 = vst [vmem:[#allocation4] sm:$0xff] %v1677
        %1686 = vst [vmem:[#allocation4 + $0x8] sm:$0xff] %v1678
        %1687 = vst [vmem:[#allocation4 + $0x10] sm:$0xff] %v1679
        %1688 = vst [vmem:[#allocation4 + $0x18] sm:$0xff] %v1680
        %1689 = vst [vmem:[#allocation4 + $0x20] sm:$0xff] %v1681
        %1690 = vst [vmem:[#allocation4 + $0x28] sm:$0xff] %v1682
        %1691 = vst [vmem:[#allocation4 + $0x30] sm:$0xff] %v1683
        %1692 = vst [vmem:[#allocation4 + $0x38] sm:$0x7f] %v1684
        %v1693 = vld [vmem:[#allocation3] ss:$2 sm:$0xff]
        %s1694 = scalar_lea.vmem [#allocation3], 16
        %v1695 = vld [vmem:[%s1694] ss:$2 sm:$0xff]
        %s1696 = scalar_lea.vmem [#allocation3], 32
        %v1697 = vld [vmem:[%s1696] ss:$2 sm:$0xff]
        %s1698 = scalar_lea.vmem [#allocation3], 48
        %v1699 = vld [vmem:[%s1698] ss:$2 sm:$0xff]
        %s1700 = scalar_lea.vmem [#allocation3], 1
        %v1701 = vld [vmem:[%s1700] ss:$2 sm:$0xff]
        %s1702 = scalar_lea.vmem [#allocation3], 17
        %v1703 = vld [vmem:[%s1702] ss:$2 sm:$0xff]
        %s1704 = scalar_lea.vmem [#allocation3], 33
        %v1705 = vld [vmem:[%s1704] ss:$2 sm:$0xff]
        %s1706 = scalar_lea.vmem [#allocation3], 49
        %v1707 = vld [vmem:[%s1706] ss:$2 sm:$0xff]
        %v1708 = vmax.f32 %v1693, %v1701
        %v1709 = vmax.f32 %v1695, %v1703
        %v1710 = vmax.f32 %v1697, %v1705
        %v1711 = vmax.f32 %v1699, %v1707
        %1712 = vrot.lane.b32.xlu0 %v1708, 120
        %v1713 = vpop.permute.xlu0 %1712
        %1714 = vrot.lane.b32.xlu0 %v1709, 120
        %v1715 = vpop.permute.xlu0 %1714
        %1716 = vrot.lane.b32.xlu0 %v1710, 120
        %v1717 = vpop.permute.xlu0 %1716
        %1718 = vrot.lane.b32.xlu0 %v1711, 120
        %v1719 = vpop.permute.xlu0 %1718
        %v1720 = vmax.f32 %v1708, %v1713
        %v1721 = vmax.f32 %v1709, %v1715
        %v1722 = vmax.f32 %v1710, %v1717
        %v1723 = vmax.f32 %v1711, %v1719
        %v1724 = vld [vmem:[#allocation4] ss:$2 sm:$0xff]
        %s1725 = scalar_lea.vmem [#allocation4], 16
        %v1726 = vld [vmem:[%s1725] ss:$2 sm:$0xff]
        %s1727 = scalar_lea.vmem [#allocation4], 32
        %v1728 = vld [vmem:[%s1727] ss:$2 sm:$0xff]
        %s1729 = scalar_lea.vmem [#allocation4], 48
        %v1730 = vld [vmem:[%s1729] ss:$2 sm:$0xff]
        %s1731 = scalar_lea.vmem [#allocation4], 1
        %v1732 = vld [vmem:[%s1731] ss:$2 sm:$0xff]
        %s1733 = scalar_lea.vmem [#allocation4], 17
        %v1734 = vld [vmem:[%s1733] ss:$2 sm:$0xff]
        %s1735 = scalar_lea.vmem [#allocation4], 33
        %v1736 = vld [vmem:[%s1735] ss:$2 sm:$0xff]
        %s1737 = scalar_lea.vmem [#allocation4], 49
        %v1738 = vld [vmem:[%s1737] ss:$2 sm:$0xff]
        %v1739 = vmax.f32 %v1724, %v1732
        %v1740 = vmax.f32 %v1726, %v1734
        %v1741 = vmax.f32 %v1728, %v1736
        %v1742 = vmax.f32 %v1730, %v1738
        %1743 = vrot.lane.b32.xlu0 %v1739, 120
        %v1744 = vpop.permute.xlu0 %1743
        %1745 = vrot.lane.b32.xlu0 %v1740, 120
        %v1746 = vpop.permute.xlu0 %1745
        %1747 = vrot.lane.b32.xlu0 %v1741, 120
        %v1748 = vpop.permute.xlu0 %1747
        %1749 = vrot.lane.b32.xlu0 %v1742, 120
        %v1750 = vpop.permute.xlu0 %1749
        %v1751 = vmax.f32 %v1739, %v1744
        %v1752 = vmax.f32 %v1740, %v1746
        %v1753 = vmax.f32 %v1741, %v1748
        %v1754 = vmax.f32 %v1742, %v1750
        %v1755 = vadd.f32 %v1720, %v1751
        %v1756 = vadd.f32 %v1721, %v1752
        %v1757 = vadd.f32 %v1722, %v1753
        %v1758 = vadd.f32 %v1723, %v1754
        %1759 = vst [vmem:[%s421] sm:$0xff] %v1755
        %1760 = vst [vmem:[%s421 + $0x8] sm:$0xff] %v1756
        %1761 = vst [vmem:[%s421 + $0x10] sm:$0xff] %v1757
        %1762 = vst [vmem:[%s421 + $0x18] sm:$0xff] %v1758
        %s1763 = sand.u32 %s252, 1
        %s1764 = scalar_lea.sflag [#allocation7], %s1763
        %s1765 = sand.u32 %s252, 1
        %s1766 = smul.addr %s1765, 32
        %s1767 = scalar_lea.vmem [#allocation13], %s1766
        // Predicated region
        $region77: #{tpu_custom_call.1} parent=59 // pred_check
          %p1768 = pneg %p262
        $region78: #{tpu_custom_call.1} parent=59 // pred_check_branch
          %1770 = sbr.rel (%p1768) target = $region80
        $region79: #{tpu_custom_call.1} parent=59 // pred_region
          %s1772 = ssub.s32 512, 512
          %1773 = vsyncadd %s1764, %s1772
          %s1774 = smul.addr %s29, 4
          %s1775 = smul.addr %s1774, 128
          %s1776 = scalar_lea.hbm %s10, %s1775
          %s1777 = sshll.u32 %s1767, 4
          %s1778 = int_to_ptr.vmem [resolvable:$true] %s1777
          %1783 = dma.vmem_to_hbm [thread:$0]  %s1778, 512, %s1776, %s1764, 128, 128, 8
        $region80: #{tpu_custom_call.1} parent=59 // pred_fallthru
          _
      $region60: #{tpu_custom_call.1} parent=5 // pred_fallthru
        _
      %p1784 = scmp.le.s32.totalorder 2, %s24
      // Predicated region
      $region81: #{tpu_custom_call.1} parent=5 // pred_check
        %p1785 = pneg %p1784
      $region82: #{tpu_custom_call.1} parent=5 // pred_check_branch
        %1787 = sbr.rel (%p1785) target = $region84
      $region83: #{tpu_custom_call.1} parent=5 // pred_region
        %s1788 = ssub.s32 %s24, 2
        // Predicated region
        $region85: #{tpu_custom_call.1} parent=83 // pred_check
          %p1789 = pneg %p268
        $region86: #{tpu_custom_call.1} parent=83 // pred_check_branch
          %1791 = sbr.rel (%p1789) target = $region88
        $region87: #{tpu_custom_call.1} parent=83 // pred_region
          %s1792 = sand.u32 %s253, 1
          %s1793 = scalar_lea.sflag [#allocation7], %s1792
          %s1794 = sand.u32 %s253, 1
          %s1795 = smul.addr %s1794, 32
          %s1796 = scalar_lea.vmem [#allocation13], %s1795
          %1797 = dma.done %s1793, 512
        $region88: #{tpu_custom_call.1} parent=83 // pred_fallthru
          _
      $region84: #{tpu_custom_call.1} parent=5 // pred_fallthru
        _
    $region6: #{tpu_custom_call.1} parent=1 // loop_footer
      %s28 = sadd.s32 1, %s24
    $region7: #{tpu_custom_call.1} parent=1 // loop_footer_branch
      %23 = sbr.rel target = $region3
    $region8: #{tpu_custom_call.1} parent=1 // loop_exit
      _
    %1798 = vsyncpa [#allocation6], 1
    %s1799 = scalar_lea.sflag [#allocation6], 1
    %1800 = vsyncpa %s1799, 1
    %1801 = vsyncpa [#allocation9], 1
    %1802 = vsyncpa [#allocation12], 1
    %1803 = vsyncpa [#allocation7], 1
    %s1804 = scalar_lea.sflag [#allocation7], 1
    %1805 = vsyncpa %s1804, 1

</llo_original>
